<compile_context>
chip_gen: v5e
topology: v5e:2x2
jax: 0.10.0
libtpu: 0.0.40
codegen_flags: <defaults>
</compile_context>

<pallas_src>
from functools import partial

import jax
import jax.numpy as jnp
from jax.experimental import pallas as pl
from jax.experimental.pallas import tpu as pltpu


# ----------------------------------------------------------------------------
# Generation-aware VMEM planning
# ----------------------------------------------------------------------------
def _vmem_plan():
    """Returns (vmem_limit_bytes, tile_budget_bytes) derived from the chip's VMEM."""
    try:
        cap = int(pltpu.get_tpu_info().vmem_capacity_bytes)  # 128 MiB v5e/v6e, 64 MiB v7x
    except Exception:
        cap = 0
    if cap < 16 * 1024 * 1024:
        cap = 64 * 1024 * 1024  # conservative default (v7x per-core figure)
    limit = min((cap * 3) // 4, 96 * 1024 * 1024)
    budget = limit // 2  # headroom for double-buffered streamed tiles
    return limit, budget


def _resident_spec(block_shape, index_map, single_buffer):
    """BlockSpec for an operand whose block never changes (weights / bias).

    single_buffer=True keeps a single VMEM copy (pl.Buffered(1)) instead of
    double-buffering something that is never re-fetched — halves its footprint,
    which matters most under v7x's 64 MiB VMEM.
    """
    if single_buffer:
        return pl.BlockSpec(block_shape, index_map, pipeline_mode=pl.Buffered(1))
    return pl.BlockSpec(block_shape, index_map)


def _pick_tm(M, I, G, budget_bytes):
    """Row-tile for the projection: biggest multiple of 8 that fits the budget."""
    resident = I * G * 2 + G * 4            # bf16 W_ih^T + f32 bias (single-buffered)
    per_row = 2 * 4 * (I + G)               # double-buffered f32 x-tile + out-tile
    avail = max(budget_bytes - resident, 2 * 1024 * 1024)
    tm = avail // per_row
    tm = max(8, min(1024, (tm // 8) * 8))
    return int(min(tm, M))


def _pick_ts(S, TB, G, H, budget_bytes, whh_bytes):
    """Timesteps per recurrence grid step (8-16, divisor of S when possible)."""
    cand = None
    for ts in (16, 8):
        if S % ts == 0:
            cand = ts
            break
    if cand is None:
        cand = min(S, 8)
    per_step = 2 * 4 * TB * (G + H)         # double-buffered f32 xp-tile + out-tile
    avail = max(budget_bytes - whh_bytes, 2 * 1024 * 1024)
    while cand > 1 and cand * per_step > avail:
        cand = max(1, cand // 2)
    return int(cand)


# ----------------------------------------------------------------------------
# Kernel 1: fused input projection  xp = x @ W_ih^T + (b_ih + b_hh)
# ----------------------------------------------------------------------------
def _input_proj_kernel(x_ref, w_ref, b_ref, o_ref):
    # x_ref: (TM, I) f32 streamed; w_ref: (I, 4H) bf16 resident; b_ref: (1, 4H) f32 resident.
    y = jnp.dot(x_ref[...].astype(w_ref.dtype), w_ref[...],
                preferred_element_type=jnp.float32)
    o_ref[...] = (y + b_ref[...]).astype(o_ref.dtype)


def _input_projection(x2d, w_ihT, bias, vmem_limit, tile_budget, single_buffer):
    """x2d: (M, I) f32, w_ihT: (I, 4H) bf16, bias: (4H,) f32  ->  (M, 4H) f32."""
    M, I = x2d.shape
    G = w_ihT.shape[1]  # 4 * H
    TM = _pick_tm(M, I, G, tile_budget)
    grid = (pl.cdiv(M, TM),)

    cost = pl.CostEstimate(
        flops=2 * M * I * G,
        transcendentals=0,
        bytes_accessed=4 * M * I + 2 * I * G + 4 * G + 4 * M * G,
    )

    return pl.pallas_call(
        _input_proj_kernel,
        out_shape=jax.ShapeDtypeStruct((M, G), jnp.float32),
        grid_spec=pltpu.PrefetchScalarGridSpec(
            num_scalar_prefetch=0,
            grid=grid,
            in_specs=[
                pl.BlockSpec((TM, I), lambda i: (i, 0)),                 # streamed row tiles
                _resident_spec((I, G), lambda i: (0, 0), single_buffer),  # resident weight
                _resident_spec((1, G), lambda i: (0, 0), single_buffer),  # resident folded bias
            ],
            out_specs=pl.BlockSpec((TM, G), lambda i: (i, 0)),           # lane-dense 4H output
        ),
        compiler_params=pltpu.CompilerParams(
            dimension_semantics=("parallel",),        # independent row tiles -> megacore
            vmem_limit_bytes=vmem_limit,
        ),
        cost_estimate=cost,
    )(x2d, w_ihT, bias.reshape(1, G))


# ----------------------------------------------------------------------------
# Kernel 2: time-blocked LSTM recurrence (h/c carried in VMEM scratch)
# ----------------------------------------------------------------------------
def _lstm_block_kernel(xp_ref, whh_ref, out_ref, h_sc, c_sc):
    # xp_ref : (TS, TB, 4H) f32   precomputed x_t @ W_ih^T + (b_ih + b_hh)
    # whh_ref: (H, 4H) bf16       resident recurrent weight
    # out_ref: (TS, TB, H) f32
    # h_sc/c_sc: (TB, H) f32      state carried across time blocks
    tb = pl.program_id(1)

    @pl.when(tb == 0)
    def _():
        h_sc[...] = jnp.zeros_like(h_sc)  # PyTorch default: zero initial state
        c_sc[...] = jnp.zeros_like(c_sc)

    H = h_sc.shape[-1]
    TS = xp_ref.shape[0]
    w = whh_ref[...]

    h = h_sc[...]
    c = c_sc[...]
    # Fully unrolled time block (TS is a compile-time constant == fori_loop(unroll=True)):
    # amortizes the ~0.35 us/grid-step overhead and the tiny per-step DMA over TS steps.
    for ts in range(TS):
        gates = xp_ref[ts] + jnp.dot(h.astype(w.dtype), w,
                                     preferred_element_type=jnp.float32)
        # Gate math stays f32 (v5e VPU/EUP have no bf16 path).  NOTE: the four slices
        # are sub-128-lane when H < 128; keep H a multiple of 128 in production.
        i_g = jax.nn.sigmoid(gates[:, 0 * H:1 * H])
        f_g = jax.nn.sigmoid(gates[:, 1 * H:2 * H])
        g_g = jnp.tanh(gates[:, 2 * H:3 * H])
        o_g = jax.nn.sigmoid(gates[:, 3 * H:4 * H])
        c = f_g * c + i_g * g_g
        h = o_g * jnp.tanh(c)
        out_ref[ts] = h.astype(out_ref.dtype)

    h_sc[...] = h
    c_sc[...] = c


def _lstm_recurrence(xp_sbg, w_hhT, vmem_limit, tile_budget, single_buffer):
    """xp_sbg: (S, Bp, 4H) f32, w_hhT: (H, 4H) bf16  ->  (S, Bp, H) f32."""
    S, Bp, G = xp_sbg.shape
    H = G // 4

    # Batch tiling: split only when batch is large enough to keep the MXU M-dim full;
    # on v7x the "parallel" batch-tile axis runs on both TensorCores.
    TB = 256 if Bp >= 512 else Bp
    n_bt = pl.cdiv(Bp, TB)

    whh_bytes = H * G * w_hhT.dtype.itemsize
    TS = _pick_ts(S, TB, G, H, tile_budget, whh_bytes)
    n_tb = pl.cdiv(S, TS)

    return pl.pallas_call(
        _lstm_block_kernel,
        out_shape=jax.ShapeDtypeStruct((S, Bp, H), jnp.float32),
        grid_spec=pltpu.PrefetchScalarGridSpec(
            num_scalar_prefetch=0,
            grid=(n_bt, n_tb),
            in_specs=[
                pl.BlockSpec((TS, TB, G), lambda bt, tb: (tb, bt, 0)),      # TS-step xp slab
                _resident_spec((H, G), lambda bt, tb: (0, 0), single_buffer),  # resident W_hh^T
            ],
            out_specs=pl.BlockSpec((TS, TB, H), lambda bt, tb: (tb, bt, 0)),
            scratch_shapes=[
                pltpu.VMEM((TB, H), jnp.float32),  # h carry
                pltpu.VMEM((TB, H), jnp.float32),  # c carry
            ],
        ),
        compiler_params=pltpu.CompilerParams(
            # batch tiles independent; time axis is a true recurrence (innermost).
            dimension_semantics=("parallel", "arbitrary"),
            vmem_limit_bytes=vmem_limit,
        ),
    )(xp_sbg, w_hhT)


# ----------------------------------------------------------------------------
# Wrapper matching SingleRNN('LSTM', I, H).forward
# ----------------------------------------------------------------------------
def prepare_params(w_ih, w_hh, b_ih, b_hh):
    """One-time prep: transpose weights, cast them to bf16 for the MXU, fold biases."""
    return (w_ih.T.astype(jnp.bfloat16),
            w_hh.T.astype(jnp.bfloat16),
            (b_ih + b_hh).astype(jnp.float32))


@partial(jax.jit, static_argnames=("single_buffer_weights",))
def single_rnn_lstm(x, w_ihT, w_hhT, bias, single_buffer_weights=True):
    """x: (B, S, I) f32; w_ihT: (I, 4H) bf16; w_hhT: (H, 4H) bf16; bias: (4H,) f32.
    Returns (B, S, H) f32."""
    B, S, I = x.shape
    G = w_ihT.shape[1]
    vmem_limit, tile_budget = _vmem_plan()

    # Pad batch to a sublane multiple so the recurrence matmul / vregs use all 8
    # sublanes (B=2 would leave the MXU M dimension almost empty).
    Bp = max(8, ((B + 7) // 8) * 8)
    if Bp != B:
        x = jnp.pad(x, ((0, Bp - B), (0, 0), (0, 0)))

    # Time-major layout so the recurrence reads one dense (TS, Bp, 4H) slab per step.
    # TODO(synk): the two wrapper transposes still round-trip HBM; fold them into the
    #             kernels (allow_input_fusion / in-kernel relayout) if profiles show them.
    xt = jnp.transpose(x, (1, 0, 2)).reshape(S * Bp, I)
    xp = _input_projection(xt, w_ihT, bias, vmem_limit, tile_budget,
                           single_buffer_weights).reshape(S, Bp, G)
    out_sbh = _lstm_recurrence(xp, w_hhT, vmem_limit, tile_budget,
                               single_buffer_weights)
    return jnp.transpose(out_sbh, (1, 0, 2))[:B]


# ----------------------------------------------------------------------------
# Pure-JAX reference (PyTorch nn.LSTM semantics, gate order i,f,g,o), f32 weights
# ----------------------------------------------------------------------------
def lstm_reference(x, w_ih, w_hh, b_ih, b_hh):
    B, S, I = x.shape
    H = w_hh.shape[1]

    def step(carry, x_t):
        h, c = carry
        gates = x_t @ w_ih.T + b_ih + h @ w_hh.T + b_hh
        i = jax.nn.sigmoid(gates[:, 0 * H:1 * H])
        f = jax.nn.sigmoid(gates[:, 1 * H:2 * H])
        g = jnp.tanh(gates[:, 2 * H:3 * H])
        o = jax.nn.sigmoid(gates[:, 3 * H:4 * H])
        c = f * c + i * g
        h = o * jnp.tanh(c)
        return (h, c), h

    h0 = jnp.zeros((B, H), jnp.float32)
    c0 = jnp.zeros((B, H), jnp.float32)
    _, ys = jax.lax.scan(step, (h0, c0), jnp.transpose(x, (1, 0, 2)))
    return jnp.transpose(ys, (1, 0, 2))


if __name__ == "__main__":
    key = jax.random.PRNGKey(0)
    kx, k1, k2, k3, k4 = jax.random.split(key, 5)

    B, S, I, H = 2, 8, 32, 32  # batch, seq, input_size, hidden_size (4H = 128 -> lane-dense)
    x = jax.random.normal(kx, (B, S, I), dtype=jnp.float32)

    # PyTorch LSTM init: uniform(-1/sqrt(H), 1/sqrt(H)); gate order [i, f, g, o].
    bound = 1.0 / (H ** 0.5)
    w_ih = jax.random.uniform(k1, (4 * H, I), jnp.float32, -bound, bound)
    w_hh = jax.random.uniform(k2, (4 * H, H), jnp.float32, -bound, bound)
    b_ih = jax.random.uniform(k3, (4 * H,), jnp.float32, -bound, bound)
    b_hh = jax.random.uniform(k4, (4 * H,), jnp.float32, -bound, bound)

    # One-time param prep (transpose + bf16 cast + bias fold; not per call).
    w_ihT, w_hhT, bias = prepare_params(w_ih, w_hh, b_ih, b_hh)

    try:
        out = jax.block_until_ready(
            single_rnn_lstm(x, w_ihT, w_hhT, bias, single_buffer_weights=True))
    except Exception:
        # Fallback for Pallas builds without BlockSpec pipeline_mode / Buffered(1) support.
        out = jax.block_until_ready(
            single_rnn_lstm(x, w_ihT, w_hhT, bias, single_buffer_weights=False))

    ref = lstm_reference(x, w_ih, w_hh, b_ih, b_hh)
    assert out.shape == (B, S, H)
    # bf16 MXU operands vs an f32 reference -> tolerance loosened accordingly.
    assert jnp.allclose(out, ref, atol=3e-2, rtol=3e-2), "mismatch vs reference"

    print("KERNEL_OK")
</pallas_src>

<mosaic_0001>
module attributes {stable_mosaic.version = 11 : i64} {
  func.func @_input_proj_kernel(%arg0: i32, %arg1: memref<64x32xf32, #tpu.memory_space<vmem>>, %arg2: memref<32x128xbf16, #tpu.memory_space<vmem>>, %arg3: memref<1x128xf32, #tpu.memory_space<vmem>>, %arg4: memref<64x128xf32, #tpu.memory_space<vmem>>) attributes {dimension_semantics = [#tpu.dimension_semantics<parallel>], iteration_bounds = array<i64: 1>, scalar_prefetch = 0 : i64, scratch_operands = 0 : i64, tpu.core_type = #tpu.core_type<tc>, window_params = [{transform_indices = @transform_0, window_bounds = array<i64: 64, 32>}, {pipeline_mode = #tpu.pipeline_mode<synchronous>, transform_indices = @transform_1, window_bounds = array<i64: 32, 128>}, {pipeline_mode = #tpu.pipeline_mode<synchronous>, transform_indices = @transform_2, window_bounds = array<i64: 1, 128>}, {transform_indices = @transform_3, window_bounds = array<i64: 64, 128>}]} {
    %c0 = arith.constant 0 : index
    %c0_0 = arith.constant 0 : index
    %0 = vector.load %arg1[%c0, %c0_0] : memref<64x32xf32, #tpu.memory_space<vmem>>, vector<64x32xf32>
    %1 = arith.truncf %0 : vector<64x32xf32> to vector<64x32xbf16>
    %c0_1 = arith.constant 0 : index
    %c0_2 = arith.constant 0 : index
    %2 = vector.load %arg2[%c0_1, %c0_2] : memref<32x128xbf16, #tpu.memory_space<vmem>>, vector<32x128xbf16>
    %cst = arith.constant dense<0.000000e+00> : vector<64x128xf32>
    %3 = tpu.matmul %1, %2, %cst {dimension_numbers = #tpu.dot_dimension_numbers<[1], [0], [0], [1], [0, 0, 1, 1], [], []>} : vector<64x32xbf16>, vector<32x128xbf16>, vector<64x128xf32> -> vector<64x128xf32>
    %c0_3 = arith.constant 0 : index
    %c0_4 = arith.constant 0 : index
    %4 = vector.load %arg3[%c0_3, %c0_4] : memref<1x128xf32, #tpu.memory_space<vmem>>, vector<1x128xf32>
    %5 = vector.broadcast %4 : vector<1x128xf32> to vector<64x128xf32>
    %6 = arith.addf %3, %5 : vector<64x128xf32>
    %c0_5 = arith.constant 0 : index
    %c0_6 = arith.constant 0 : index
    %7 = vector.load %arg4[%c0_5, %c0_6] : memref<64x128xf32, #tpu.memory_space<vmem>>, vector<64x128xf32>
    tpu.vector_store %arg4[%c0_5, %c0_6], %6 {strides = array<i32>} : memref<64x128xf32, #tpu.memory_space<vmem>>, vector<64x128xf32>,
    return
  }
  func.func @transform_0(%arg0: i32) -> (i32, i32) {
    %c0_i32 = arith.constant 0 : i32
    %c0_i32_0 = arith.constant 0 : i32
    return %arg0, %c0_i32 : i32, i32
  }
  func.func @transform_1(%arg0: i32) -> (i32, i32) {
    %c0_i32 = arith.constant 0 : i32
    %c0_i32_0 = arith.constant 0 : i32
    %c0_i32_1 = arith.constant 0 : i32
    return %c0_i32, %c0_i32_0 : i32, i32
  }
  func.func @transform_2(%arg0: i32) -> (i32, i32) {
    %c0_i32 = arith.constant 0 : i32
    %c0_i32_0 = arith.constant 0 : i32
    %c0_i32_1 = arith.constant 0 : i32
    return %c0_i32, %c0_i32_0 : i32, i32
  }
  func.func @transform_3(%arg0: i32) -> (i32, i32) {
    %c0_i32 = arith.constant 0 : i32
    %c0_i32_0 = arith.constant 0 : i32
    return %arg0, %c0_i32 : i32, i32
  }
}

module attributes {stable_mosaic.version = 11 : i64} {
  func.func @_lstm_block_kernel(%arg0: i32, %arg1: i32, %arg2: memref<8x8x128xf32, #tpu.memory_space<vmem>>, %arg3: memref<32x128xbf16, #tpu.memory_space<vmem>>, %arg4: memref<8x8x32xf32, #tpu.memory_space<vmem>>, %arg5: memref<8x32xf32, #tpu.memory_space<vmem>>, %arg6: memref<8x32xf32, #tpu.memory_space<vmem>>) attributes {dimension_semantics = [#tpu.dimension_semantics<parallel>, #tpu.dimension_semantics<arbitrary>], iteration_bounds = array<i64: 1, 1>, scalar_prefetch = 0 : i64, scratch_operands = 2 : i64, tpu.core_type = #tpu.core_type<tc>, window_params = [{transform_indices = @transform_0, window_bounds = array<i64: 8, 8, 128>}, {pipeline_mode = #tpu.pipeline_mode<synchronous>, transform_indices = @transform_1, window_bounds = array<i64: 32, 128>}, {transform_indices = @transform_2, window_bounds = array<i64: 8, 8, 32>}]} {
    %c0_i32 = arith.constant 0 : i32
    %0 = arith.cmpi eq, %arg1, %c0_i32 : i32
    %1 = arith.extui %0 : i1 to i32
    %c0_i32_0 = arith.constant 0 : i32
    %2 = arith.cmpi ne, %1, %c0_i32_0 : i32
    scf.if %2 {
      %cst_82 = arith.constant 0.000000e+00 : f32
      %272 = vector.broadcast %cst_82 : f32 to vector<8x32xf32>
      %c0_83 = arith.constant 0 : index
      %c0_84 = arith.constant 0 : index
      %273 = vector.load %arg5[%c0_83, %c0_84] : memref<8x32xf32, #tpu.memory_space<vmem>>, vector<8x32xf32>
      tpu.vector_store %arg5[%c0_83, %c0_84], %272 {strides = array<i32>} : memref<8x32xf32, #tpu.memory_space<vmem>>, vector<8x32xf32>,
      %cst_85 = arith.constant 0.000000e+00 : f32
      %274 = vector.broadcast %cst_85 : f32 to vector<8x32xf32>
      %c0_86 = arith.constant 0 : index
      %c0_87 = arith.constant 0 : index
      %275 = vector.load %arg6[%c0_86, %c0_87] : memref<8x32xf32, #tpu.memory_space<vmem>>, vector<8x32xf32>
      tpu.vector_store %arg6[%c0_86, %c0_87], %274 {strides = array<i32>} : memref<8x32xf32, #tpu.memory_space<vmem>>, vector<8x32xf32>,
    } else {
    }
    %c0 = arith.constant 0 : index
    %c0_1 = arith.constant 0 : index
    %3 = vector.load %arg3[%c0, %c0_1] : memref<32x128xbf16, #tpu.memory_space<vmem>>, vector<32x128xbf16>
    %c0_2 = arith.constant 0 : index
    %c0_3 = arith.constant 0 : index
    %4 = vector.load %arg5[%c0_2, %c0_3] : memref<8x32xf32, #tpu.memory_space<vmem>>, vector<8x32xf32>
    %c0_4 = arith.constant 0 : index
    %c0_5 = arith.constant 0 : index
    %5 = vector.load %arg6[%c0_4, %c0_5] : memref<8x32xf32, #tpu.memory_space<vmem>>, vector<8x32xf32>
    %c0_6 = arith.constant 0 : index
    %c0_7 = arith.constant 0 : index
    %c0_8 = arith.constant 0 : index
    %6 = vector.load %arg2[%c0_6, %c0_7, %c0_8] : memref<8x8x128xf32, #tpu.memory_space<vmem>>, vector<1x8x128xf32>
    %7 = vector.shape_cast %6 : vector<1x8x128xf32> to vector<8x128xf32>
    %8 = arith.truncf %4 : vector<8x32xf32> to vector<8x32xbf16>
    %cst = arith.constant dense<0.000000e+00> : vector<8x128xf32>
    %9 = tpu.matmul %8, %3, %cst {dimension_numbers = #tpu.dot_dimension_numbers<[1], [0], [0], [1], [0, 0, 1, 1], [], []>} : vector<8x32xbf16>, vector<32x128xbf16>, vector<8x128xf32> -> vector<8x128xf32>
    %10 = arith.addf %7, %9 : vector<8x128xf32>
    %11 = vector.extract_strided_slice %10 {offsets = [0, 0], sizes = [8, 32], strides = [1, 1]} : vector<8x128xf32> to vector<8x32xf32>
    %12 = arith.negf %11 : vector<8x32xf32>
    %13 = math.exp %12 : vector<8x32xf32>
    %cst_9 = arith.constant 1.000000e+00 : f32
    %14 = vector.broadcast %cst_9 : f32 to vector<8x32xf32>
    %15 = arith.addf %14, %13 : vector<8x32xf32>
    %16 = arith.divf %14, %15 : vector<8x32xf32>
    %17 = vector.extract_strided_slice %10 {offsets = [0, 32], sizes = [8, 32], strides = [1, 1]} : vector<8x128xf32> to vector<8x32xf32>
    %18 = arith.negf %17 : vector<8x32xf32>
    %19 = math.exp %18 : vector<8x32xf32>
    %cst_10 = arith.constant 1.000000e+00 : f32
    %20 = vector.broadcast %cst_10 : f32 to vector<8x32xf32>
    %21 = arith.addf %20, %19 : vector<8x32xf32>
    %22 = arith.divf %20, %21 : vector<8x32xf32>
    %23 = vector.extract_strided_slice %10 {offsets = [0, 64], sizes = [8, 32], strides = [1, 1]} : vector<8x128xf32> to vector<8x32xf32>
    %24 = math.tanh %23 : vector<8x32xf32>
    %25 = vector.extract_strided_slice %10 {offsets = [0, 96], sizes = [8, 32], strides = [1, 1]} : vector<8x128xf32> to vector<8x32xf32>
    %26 = arith.negf %25 : vector<8x32xf32>
    %27 = math.exp %26 : vector<8x32xf32>
    %cst_11 = arith.constant 1.000000e+00 : f32
    %28 = vector.broadcast %cst_11 : f32 to vector<8x32xf32>
    %29 = arith.addf %28, %27 : vector<8x32xf32>
    %30 = arith.divf %28, %29 : vector<8x32xf32>
    %31 = arith.mulf %22, %5 : vector<8x32xf32>
    %32 = arith.mulf %16, %24 : vector<8x32xf32>
    %33 = arith.addf %31, %32 : vector<8x32xf32>
    %34 = math.tanh %33 : vector<8x32xf32>
    %35 = arith.mulf %30, %34 : vector<8x32xf32>
    %c0_12 = arith.constant 0 : index
    %c0_13 = arith.constant 0 : index
    %c0_14 = arith.constant 0 : index
    %36 = vector.load %arg4[%c0_12, %c0_13, %c0_14] : memref<8x8x32xf32, #tpu.memory_space<vmem>>, vector<1x8x32xf32>
    %37 = vector.shape_cast %36 : vector<1x8x32xf32> to vector<8x32xf32>
    %38 = vector.shape_cast %35 : vector<8x32xf32> to vector<1x8x32xf32>
    tpu.vector_store %arg4[%c0_12, %c0_13, %c0_14], %38 {strides = array<i32>} : memref<8x8x32xf32, #tpu.memory_space<vmem>>, vector<1x8x32xf32>,
    %c1 = arith.constant 1 : index
    %c0_15 = arith.constant 0 : index
    %c0_16 = arith.constant 0 : index
    %39 = vector.load %arg2[%c1, %c0_15, %c0_16] : memref<8x8x128xf32, #tpu.memory_space<vmem>>, vector<1x8x128xf32>
    %40 = vector.shape_cast %39 : vector<1x8x128xf32> to vector<8x128xf32>
    %41 = arith.truncf %35 : vector<8x32xf32> to vector<8x32xbf16>
    %cst_17 = arith.constant dense<0.000000e+00> : vector<8x128xf32>
    %42 = tpu.matmul %41, %3, %cst_17 {dimension_numbers = #tpu.dot_dimension_numbers<[1], [0], [0], [1], [0, 0, 1, 1], [], []>} : vector<8x32xbf16>, vector<32x128xbf16>, vector<8x128xf32> -> vector<8x128xf32>
    %43 = arith.addf %40, %42 : vector<8x128xf32>
    %44 = vector.extract_strided_slice %43 {offsets = [0, 0], sizes = [8, 32], strides = [1, 1]} : vector<8x128xf32> to vector<8x32xf32>
    %45 = arith.negf %44 : vector<8x32xf32>
    %46 = math.exp %45 : vector<8x32xf32>
    %cst_18 = arith.constant 1.000000e+00 : f32
    %47 = vector.broadcast %cst_18 : f32 to vector<8x32xf32>
    %48 = arith.addf %47, %46 : vector<8x32xf32>
    %49 = arith.divf %47, %48 : vector<8x32xf32>
    %50 = vector.extract_strided_slice %43 {offsets = [0, 32], sizes = [8, 32], strides = [1, 1]} : vector<8x128xf32> to vector<8x32xf32>
    %51 = arith.negf %50 : vector<8x32xf32>
    %52 = math.exp %51 : vector<8x32xf32>
    %cst_19 = arith.constant 1.000000e+00 : f32
    %53 = vector.broadcast %cst_19 : f32 to vector<8x32xf32>
    %54 = arith.addf %53, %52 : vector<8x32xf32>
    %55 = arith.divf %53, %54 : vector<8x32xf32>
    %56 = vector.extract_strided_slice %43 {offsets = [0, 64], sizes = [8, 32], strides = [1, 1]} : vector<8x128xf32> to vector<8x32xf32>
    %57 = math.tanh %56 : vector<8x32xf32>
    %58 = vector.extract_strided_slice %43 {offsets = [0, 96], sizes = [8, 32], strides = [1, 1]} : vector<8x128xf32> to vector<8x32xf32>
    %59 = arith.negf %58 : vector<8x32xf32>
    %60 = math.exp %59 : vector<8x32xf32>
    %cst_20 = arith.constant 1.000000e+00 : f32
    %61 = vector.broadcast %cst_20 : f32 to vector<8x32xf32>
    %62 = arith.addf %61, %60 : vector<8x32xf32>
    %63 = arith.divf %61, %62 : vector<8x32xf32>
    %64 = arith.mulf %55, %33 : vector<8x32xf32>
    %65 = arith.mulf %49, %57 : vector<8x32xf32>
    %66 = arith.addf %64, %65 : vector<8x32xf32>
    %67 = math.tanh %66 : vector<8x32xf32>
    %68 = arith.mulf %63, %67 : vector<8x32xf32>
    %c1_21 = arith.constant 1 : index
    %c0_22 = arith.constant 0 : index
    %c0_23 = arith.constant 0 : index
    %69 = vector.load %arg4[%c1_21, %c0_22, %c0_23] : memref<8x8x32xf32, #tpu.memory_space<vmem>>, vector<1x8x32xf32>
    %70 = vector.shape_cast %69 : vector<1x8x32xf32> to vector<8x32xf32>
    %71 = vector.shape_cast %68 : vector<8x32xf32> to vector<1x8x32xf32>
    tpu.vector_store %arg4[%c1_21, %c0_22, %c0_23], %71 {strides = array<i32>} : memref<8x8x32xf32, #tpu.memory_space<vmem>>, vector<1x8x32xf32>,
    %c2 = arith.constant 2 : index
    %c0_24 = arith.constant 0 : index
    %c0_25 = arith.constant 0 : index
    %72 = vector.load %arg2[%c2, %c0_24, %c0_25] : memref<8x8x128xf32, #tpu.memory_space<vmem>>, vector<1x8x128xf32>
    %73 = vector.shape_cast %72 : vector<1x8x128xf32> to vector<8x128xf32>
    %74 = arith.truncf %68 : vector<8x32xf32> to vector<8x32xbf16>
    %cst_26 = arith.constant dense<0.000000e+00> : vector<8x128xf32>
    %75 = tpu.matmul %74, %3, %cst_26 {dimension_numbers = #tpu.dot_dimension_numbers<[1], [0], [0], [1], [0, 0, 1, 1], [], []>} : vector<8x32xbf16>, vector<32x128xbf16>, vector<8x128xf32> -> vector<8x128xf32>
    %76 = arith.addf %73, %75 : vector<8x128xf32>
    %77 = vector.extract_strided_slice %76 {offsets = [0, 0], sizes = [8, 32], strides = [1, 1]} : vector<8x128xf32> to vector<8x32xf32>
    %78 = arith.negf %77 : vector<8x32xf32>
    %79 = math.exp %78 : vector<8x32xf32>
    %cst_27 = arith.constant 1.000000e+00 : f32
    %80 = vector.broadcast %cst_27 : f32 to vector<8x32xf32>
    %81 = arith.addf %80, %79 : vector<8x32xf32>
    %82 = arith.divf %80, %81 : vector<8x32xf32>
    %83 = vector.extract_strided_slice %76 {offsets = [0, 32], sizes = [8, 32], strides = [1, 1]} : vector<8x128xf32> to vector<8x32xf32>
    %84 = arith.negf %83 : vector<8x32xf32>
    %85 = math.exp %84 : vector<8x32xf32>
    %cst_28 = arith.constant 1.000000e+00 : f32
    %86 = vector.broadcast %cst_28 : f32 to vector<8x32xf32>
    %87 = arith.addf %86, %85 : vector<8x32xf32>
    %88 = arith.divf %86, %87 : vector<8x32xf32>
    %89 = vector.extract_strided_slice %76 {offsets = [0, 64], sizes = [8, 32], strides = [1, 1]} : vector<8x128xf32> to vector<8x32xf32>
    %90 = math.tanh %89 : vector<8x32xf32>
    %91 = vector.extract_strided_slice %76 {offsets = [0, 96], sizes = [8, 32], strides = [1, 1]} : vector<8x128xf32> to vector<8x32xf32>
    %92 = arith.negf %91 : vector<8x32xf32>
    %93 = math.exp %92 : vector<8x32xf32>
    %cst_29 = arith.constant 1.000000e+00 : f32
    %94 = vector.broadcast %cst_29 : f32 to vector<8x32xf32>
    %95 = arith.addf %94, %93 : vector<8x32xf32>
    %96 = arith.divf %94, %95 : vector<8x32xf32>
    %97 = arith.mulf %88, %66 : vector<8x32xf32>
    %98 = arith.mulf %82, %90 : vector<8x32xf32>
    %99 = arith.addf %97, %98 : vector<8x32xf32>
    %100 = math.tanh %99 : vector<8x32xf32>
    %101 = arith.mulf %96, %100 : vector<8x32xf32>
    %c2_30 = arith.constant 2 : index
    %c0_31 = arith.constant 0 : index
    %c0_32 = arith.constant 0 : index
    %102 = vector.load %arg4[%c2_30, %c0_31, %c0_32] : memref<8x8x32xf32, #tpu.memory_space<vmem>>, vector<1x8x32xf32>
    %103 = vector.shape_cast %102 : vector<1x8x32xf32> to vector<8x32xf32>
    %104 = vector.shape_cast %101 : vector<8x32xf32> to vector<1x8x32xf32>
    tpu.vector_store %arg4[%c2_30, %c0_31, %c0_32], %104 {strides = array<i32>} : memref<8x8x32xf32, #tpu.memory_space<vmem>>, vector<1x8x32xf32>,
    %c3 = arith.constant 3 : index
    %c0_33 = arith.constant 0 : index
    %c0_34 = arith.constant 0 : index
    %105 = vector.load %arg2[%c3, %c0_33, %c0_34] : memref<8x8x128xf32, #tpu.memory_space<vmem>>, vector<1x8x128xf32>
    %106 = vector.shape_cast %105 : vector<1x8x128xf32> to vector<8x128xf32>
    %107 = arith.truncf %101 : vector<8x32xf32> to vector<8x32xbf16>
    %cst_35 = arith.constant dense<0.000000e+00> : vector<8x128xf32>
    %108 = tpu.matmul %107, %3, %cst_35 {dimension_numbers = #tpu.dot_dimension_numbers<[1], [0], [0], [1], [0, 0, 1, 1], [], []>} : vector<8x32xbf16>, vector<32x128xbf16>, vector<8x128xf32> -> vector<8x128xf32>
    %109 = arith.addf %106, %108 : vector<8x128xf32>
    %110 = vector.extract_strided_slice %109 {offsets = [0, 0], sizes = [8, 32], strides = [1, 1]} : vector<8x128xf32> to vector<8x32xf32>
    %111 = arith.negf %110 : vector<8x32xf32>
    %112 = math.exp %111 : vector<8x32xf32>
    %cst_36 = arith.constant 1.000000e+00 : f32
    %113 = vector.broadcast %cst_36 : f32 to vector<8x32xf32>
    %114 = arith.addf %113, %112 : vector<8x32xf32>
    %115 = arith.divf %113, %114 : vector<8x32xf32>
    %116 = vector.extract_strided_slice %109 {offsets = [0, 32], sizes = [8, 32], strides = [1, 1]} : vector<8x128xf32> to vector<8x32xf32>
    %117 = arith.negf %116 : vector<8x32xf32>
    %118 = math.exp %117 : vector<8x32xf32>
    %cst_37 = arith.constant 1.000000e+00 : f32
    %119 = vector.broadcast %cst_37 : f32 to vector<8x32xf32>
    %120 = arith.addf %119, %118 : vector<8x32xf32>
    %121 = arith.divf %119, %120 : vector<8x32xf32>
    %122 = vector.extract_strided_slice %109 {offsets = [0, 64], sizes = [8, 32], strides = [1, 1]} : vector<8x128xf32> to vector<8x32xf32>
    %123 = math.tanh %122 : vector<8x32xf32>
    %124 = vector.extract_strided_slice %109 {offsets = [0, 96], sizes = [8, 32], strides = [1, 1]} : vector<8x128xf32> to vector<8x32xf32>
    %125 = arith.negf %124 : vector<8x32xf32>
    %126 = math.exp %125 : vector<8x32xf32>
    %cst_38 = arith.constant 1.000000e+00 : f32
    %127 = vector.broadcast %cst_38 : f32 to vector<8x32xf32>
    %128 = arith.addf %127, %126 : vector<8x32xf32>
    %129 = arith.divf %127, %128 : vector<8x32xf32>
    %130 = arith.mulf %121, %99 : vector<8x32xf32>
    %131 = arith.mulf %115, %123 : vector<8x32xf32>
    %132 = arith.addf %130, %131 : vector<8x32xf32>
    %133 = math.tanh %132 : vector<8x32xf32>
    %134 = arith.mulf %129, %133 : vector<8x32xf32>
    %c3_39 = arith.constant 3 : index
    %c0_40 = arith.constant 0 : index
    %c0_41 = arith.constant 0 : index
    %135 = vector.load %arg4[%c3_39, %c0_40, %c0_41] : memref<8x8x32xf32, #tpu.memory_space<vmem>>, vector<1x8x32xf32>
    %136 = vector.shape_cast %135 : vector<1x8x32xf32> to vector<8x32xf32>
    %137 = vector.shape_cast %134 : vector<8x32xf32> to vector<1x8x32xf32>
    tpu.vector_store %arg4[%c3_39, %c0_40, %c0_41], %137 {strides = array<i32>} : memref<8x8x32xf32, #tpu.memory_space<vmem>>, vector<1x8x32xf32>,
    %c4 = arith.constant 4 : index
    %c0_42 = arith.constant 0 : index
    %c0_43 = arith.constant 0 : index
    %138 = vector.load %arg2[%c4, %c0_42, %c0_43] : memref<8x8x128xf32, #tpu.memory_space<vmem>>, vector<1x8x128xf32>
    %139 = vector.shape_cast %138 : vector<1x8x128xf32> to vector<8x128xf32>
    %140 = arith.truncf %134 : vector<8x32xf32> to vector<8x32xbf16>
    %cst_44 = arith.constant dense<0.000000e+00> : vector<8x128xf32>
    %141 = tpu.matmul %140, %3, %cst_44 {dimension_numbers = #tpu.dot_dimension_numbers<[1], [0], [0], [1], [0, 0, 1, 1], [], []>} : vector<8x32xbf16>, vector<32x128xbf16>, vector<8x128xf32> -> vector<8x128xf32>
    %142 = arith.addf %139, %141 : vector<8x128xf32>
    %143 = vector.extract_strided_slice %142 {offsets = [0, 0], sizes = [8, 32], strides = [1, 1]} : vector<8x128xf32> to vector<8x32xf32>
    %144 = arith.negf %143 : vector<8x32xf32>
    %145 = math.exp %144 : vector<8x32xf32>
    %cst_45 = arith.constant 1.000000e+00 : f32
    %146 = vector.broadcast %cst_45 : f32 to vector<8x32xf32>
    %147 = arith.addf %146, %145 : vector<8x32xf32>
    %148 = arith.divf %146, %147 : vector<8x32xf32>
    %149 = vector.extract_strided_slice %142 {offsets = [0, 32], sizes = [8, 32], strides = [1, 1]} : vector<8x128xf32> to vector<8x32xf32>
    %150 = arith.negf %149 : vector<8x32xf32>
    %151 = math.exp %150 : vector<8x32xf32>
    %cst_46 = arith.constant 1.000000e+00 : f32
    %152 = vector.broadcast %cst_46 : f32 to vector<8x32xf32>
    %153 = arith.addf %152, %151 : vector<8x32xf32>
    %154 = arith.divf %152, %153 : vector<8x32xf32>
    %155 = vector.extract_strided_slice %142 {offsets = [0, 64], sizes = [8, 32], strides = [1, 1]} : vector<8x128xf32> to vector<8x32xf32>
    %156 = math.tanh %155 : vector<8x32xf32>
    %157 = vector.extract_strided_slice %142 {offsets = [0, 96], sizes = [8, 32], strides = [1, 1]} : vector<8x128xf32> to vector<8x32xf32>
    %158 = arith.negf %157 : vector<8x32xf32>
    %159 = math.exp %158 : vector<8x32xf32>
    %cst_47 = arith.constant 1.000000e+00 : f32
    %160 = vector.broadcast %cst_47 : f32 to vector<8x32xf32>
    %161 = arith.addf %160, %159 : vector<8x32xf32>
    %162 = arith.divf %160, %161 : vector<8x32xf32>
    %163 = arith.mulf %154, %132 : vector<8x32xf32>
    %164 = arith.mulf %148, %156 : vector<8x32xf32>
    %165 = arith.addf %163, %164 : vector<8x32xf32>
    %166 = math.tanh %165 : vector<8x32xf32>
    %167 = arith.mulf %162, %166 : vector<8x32xf32>
    %c4_48 = arith.constant 4 : index
    %c0_49 = arith.constant 0 : index
    %c0_50 = arith.constant 0 : index
    %168 = vector.load %arg4[%c4_48, %c0_49, %c0_50] : memref<8x8x32xf32, #tpu.memory_space<vmem>>, vector<1x8x32xf32>
    %169 = vector.shape_cast %168 : vector<1x8x32xf32> to vector<8x32xf32>
    %170 = vector.shape_cast %167 : vector<8x32xf32> to vector<1x8x32xf32>
    tpu.vector_store %arg4[%c4_48, %c0_49, %c0_50], %170 {strides = array<i32>} : memref<8x8x32xf32, #tpu.memory_space<vmem>>, vector<1x8x32xf32>,
    %c5 = arith.constant 5 : index
    %c0_51 = arith.constant 0 : index
    %c0_52 = arith.constant 0 : index
    %171 = vector.load %arg2[%c5, %c0_51, %c0_52] : memref<8x8x128xf32, #tpu.memory_space<vmem>>, vector<1x8x128xf32>
    %172 = vector.shape_cast %171 : vector<1x8x128xf32> to vector<8x128xf32>
    %173 = arith.truncf %167 : vector<8x32xf32> to vector<8x32xbf16>
    %cst_53 = arith.constant dense<0.000000e+00> : vector<8x128xf32>
    %174 = tpu.matmul %173, %3, %cst_53 {dimension_numbers = #tpu.dot_dimension_numbers<[1], [0], [0], [1], [0, 0, 1, 1], [], []>} : vector<8x32xbf16>, vector<32x128xbf16>, vector<8x128xf32> -> vector<8x128xf32>
    %175 = arith.addf %172, %174 : vector<8x128xf32>
    %176 = vector.extract_strided_slice %175 {offsets = [0, 0], sizes = [8, 32], strides = [1, 1]} : vector<8x128xf32> to vector<8x32xf32>
    %177 = arith.negf %176 : vector<8x32xf32>
    %178 = math.exp %177 : vector<8x32xf32>
    %cst_54 = arith.constant 1.000000e+00 : f32
    %179 = vector.broadcast %cst_54 : f32 to vector<8x32xf32>
    %180 = arith.addf %179, %178 : vector<8x32xf32>
    %181 = arith.divf %179, %180 : vector<8x32xf32>
    %182 = vector.extract_strided_slice %175 {offsets = [0, 32], sizes = [8, 32], strides = [1, 1]} : vector<8x128xf32> to vector<8x32xf32>
    %183 = arith.negf %182 : vector<8x32xf32>
    %184 = math.exp %183 : vector<8x32xf32>
    %cst_55 = arith.constant 1.000000e+00 : f32
    %185 = vector.broadcast %cst_55 : f32 to vector<8x32xf32>
    %186 = arith.addf %185, %184 : vector<8x32xf32>
    %187 = arith.divf %185, %186 : vector<8x32xf32>
    %188 = vector.extract_strided_slice %175 {offsets = [0, 64], sizes = [8, 32], strides = [1, 1]} : vector<8x128xf32> to vector<8x32xf32>
    %189 = math.tanh %188 : vector<8x32xf32>
    %190 = vector.extract_strided_slice %175 {offsets = [0, 96], sizes = [8, 32], strides = [1, 1]} : vector<8x128xf32> to vector<8x32xf32>
    %191 = arith.negf %190 : vector<8x32xf32>
    %192 = math.exp %191 : vector<8x32xf32>
    %cst_56 = arith.constant 1.000000e+00 : f32
    %193 = vector.broadcast %cst_56 : f32 to vector<8x32xf32>
    %194 = arith.addf %193, %192 : vector<8x32xf32>
    %195 = arith.divf %193, %194 : vector<8x32xf32>
    %196 = arith.mulf %187, %165 : vector<8x32xf32>
    %197 = arith.mulf %181, %189 : vector<8x32xf32>
    %198 = arith.addf %196, %197 : vector<8x32xf32>
    %199 = math.tanh %198 : vector<8x32xf32>
    %200 = arith.mulf %195, %199 : vector<8x32xf32>
    %c5_57 = arith.constant 5 : index
    %c0_58 = arith.constant 0 : index
    %c0_59 = arith.constant 0 : index
    %201 = vector.load %arg4[%c5_57, %c0_58, %c0_59] : memref<8x8x32xf32, #tpu.memory_space<vmem>>, vector<1x8x32xf32>
    %202 = vector.shape_cast %201 : vector<1x8x32xf32> to vector<8x32xf32>
    %203 = vector.shape_cast %200 : vector<8x32xf32> to vector<1x8x32xf32>
    tpu.vector_store %arg4[%c5_57, %c0_58, %c0_59], %203 {strides = array<i32>} : memref<8x8x32xf32, #tpu.memory_space<vmem>>, vector<1x8x32xf32>,
    %c6 = arith.constant 6 : index
    %c0_60 = arith.constant 0 : index
    %c0_61 = arith.constant 0 : index
    %204 = vector.load %arg2[%c6, %c0_60, %c0_61] : memref<8x8x128xf32, #tpu.memory_space<vmem>>, vector<1x8x128xf32>
    %205 = vector.shape_cast %204 : vector<1x8x128xf32> to vector<8x128xf32>
    %206 = arith.truncf %200 : vector<8x32xf32> to vector<8x32xbf16>
    %cst_62 = arith.constant dense<0.000000e+00> : vector<8x128xf32>
    %207 = tpu.matmul %206, %3, %cst_62 {dimension_numbers = #tpu.dot_dimension_numbers<[1], [0], [0], [1], [0, 0, 1, 1], [], []>} : vector<8x32xbf16>, vector<32x128xbf16>, vector<8x128xf32> -> vector<8x128xf32>
    %208 = arith.addf %205, %207 : vector<8x128xf32>
    %209 = vector.extract_strided_slice %208 {offsets = [0, 0], sizes = [8, 32], strides = [1, 1]} : vector<8x128xf32> to vector<8x32xf32>
    %210 = arith.negf %209 : vector<8x32xf32>
    %211 = math.exp %210 : vector<8x32xf32>
    %cst_63 = arith.constant 1.000000e+00 : f32
    %212 = vector.broadcast %cst_63 : f32 to vector<8x32xf32>
    %213 = arith.addf %212, %211 : vector<8x32xf32>
    %214 = arith.divf %212, %213 : vector<8x32xf32>
    %215 = vector.extract_strided_slice %208 {offsets = [0, 32], sizes = [8, 32], strides = [1, 1]} : vector<8x128xf32> to vector<8x32xf32>
    %216 = arith.negf %215 : vector<8x32xf32>
    %217 = math.exp %216 : vector<8x32xf32>
    %cst_64 = arith.constant 1.000000e+00 : f32
    %218 = vector.broadcast %cst_64 : f32 to vector<8x32xf32>
    %219 = arith.addf %218, %217 : vector<8x32xf32>
    %220 = arith.divf %218, %219 : vector<8x32xf32>
    %221 = vector.extract_strided_slice %208 {offsets = [0, 64], sizes = [8, 32], strides = [1, 1]} : vector<8x128xf32> to vector<8x32xf32>
    %222 = math.tanh %221 : vector<8x32xf32>
    %223 = vector.extract_strided_slice %208 {offsets = [0, 96], sizes = [8, 32], strides = [1, 1]} : vector<8x128xf32> to vector<8x32xf32>
    %224 = arith.negf %223 : vector<8x32xf32>
    %225 = math.exp %224 : vector<8x32xf32>
    %cst_65 = arith.constant 1.000000e+00 : f32
    %226 = vector.broadcast %cst_65 : f32 to vector<8x32xf32>
    %227 = arith.addf %226, %225 : vector<8x32xf32>
    %228 = arith.divf %226, %227 : vector<8x32xf32>
    %229 = arith.mulf %220, %198 : vector<8x32xf32>
    %230 = arith.mulf %214, %222 : vector<8x32xf32>
    %231 = arith.addf %229, %230 : vector<8x32xf32>
    %232 = math.tanh %231 : vector<8x32xf32>
    %233 = arith.mulf %228, %232 : vector<8x32xf32>
    %c6_66 = arith.constant 6 : index
    %c0_67 = arith.constant 0 : index
    %c0_68 = arith.constant 0 : index
    %234 = vector.load %arg4[%c6_66, %c0_67, %c0_68] : memref<8x8x32xf32, #tpu.memory_space<vmem>>, vector<1x8x32xf32>
    %235 = vector.shape_cast %234 : vector<1x8x32xf32> to vector<8x32xf32>
    %236 = vector.shape_cast %233 : vector<8x32xf32> to vector<1x8x32xf32>
    tpu.vector_store %arg4[%c6_66, %c0_67, %c0_68], %236 {strides = array<i32>} : memref<8x8x32xf32, #tpu.memory_space<vmem>>, vector<1x8x32xf32>,
    %c7 = arith.constant 7 : index
    %c0_69 = arith.constant 0 : index
    %c0_70 = arith.constant 0 : index
    %237 = vector.load %arg2[%c7, %c0_69, %c0_70] : memref<8x8x128xf32, #tpu.memory_space<vmem>>, vector<1x8x128xf32>
    %238 = vector.shape_cast %237 : vector<1x8x128xf32> to vector<8x128xf32>
    %239 = arith.truncf %233 : vector<8x32xf32> to vector<8x32xbf16>
    %cst_71 = arith.constant dense<0.000000e+00> : vector<8x128xf32>
    %240 = tpu.matmul %239, %3, %cst_71 {dimension_numbers = #tpu.dot_dimension_numbers<[1], [0], [0], [1], [0, 0, 1, 1], [], []>} : vector<8x32xbf16>, vector<32x128xbf16>, vector<8x128xf32> -> vector<8x128xf32>
    %241 = arith.addf %238, %240 : vector<8x128xf32>
    %242 = vector.extract_strided_slice %241 {offsets = [0, 0], sizes = [8, 32], strides = [1, 1]} : vector<8x128xf32> to vector<8x32xf32>
    %243 = arith.negf %242 : vector<8x32xf32>
    %244 = math.exp %243 : vector<8x32xf32>
    %cst_72 = arith.constant 1.000000e+00 : f32
    %245 = vector.broadcast %cst_72 : f32 to vector<8x32xf32>
    %246 = arith.addf %245, %244 : vector<8x32xf32>
    %247 = arith.divf %245, %246 : vector<8x32xf32>
    %248 = vector.extract_strided_slice %241 {offsets = [0, 32], sizes = [8, 32], strides = [1, 1]} : vector<8x128xf32> to vector<8x32xf32>
    %249 = arith.negf %248 : vector<8x32xf32>
    %250 = math.exp %249 : vector<8x32xf32>
    %cst_73 = arith.constant 1.000000e+00 : f32
    %251 = vector.broadcast %cst_73 : f32 to vector<8x32xf32>
    %252 = arith.addf %251, %250 : vector<8x32xf32>
    %253 = arith.divf %251, %252 : vector<8x32xf32>
    %254 = vector.extract_strided_slice %241 {offsets = [0, 64], sizes = [8, 32], strides = [1, 1]} : vector<8x128xf32> to vector<8x32xf32>
    %255 = math.tanh %254 : vector<8x32xf32>
    %256 = vector.extract_strided_slice %241 {offsets = [0, 96], sizes = [8, 32], strides = [1, 1]} : vector<8x128xf32> to vector<8x32xf32>
    %257 = arith.negf %256 : vector<8x32xf32>
    %258 = math.exp %257 : vector<8x32xf32>
    %cst_74 = arith.constant 1.000000e+00 : f32
    %259 = vector.broadcast %cst_74 : f32 to vector<8x32xf32>
    %260 = arith.addf %259, %258 : vector<8x32xf32>
    %261 = arith.divf %259, %260 : vector<8x32xf32>
    %262 = arith.mulf %253, %231 : vector<8x32xf32>
    %263 = arith.mulf %247, %255 : vector<8x32xf32>
    %264 = arith.addf %262, %263 : vector<8x32xf32>
    %265 = math.tanh %264 : vector<8x32xf32>
    %266 = arith.mulf %261, %265 : vector<8x32xf32>
    %c7_75 = arith.constant 7 : index
    %c0_76 = arith.constant 0 : index
    %c0_77 = arith.constant 0 : index
    %267 = vector.load %arg4[%c7_75, %c0_76, %c0_77] : memref<8x8x32xf32, #tpu.memory_space<vmem>>, vector<1x8x32xf32>
    %268 = vector.shape_cast %267 : vector<1x8x32xf32> to vector<8x32xf32>
    %269 = vector.shape_cast %266 : vector<8x32xf32> to vector<1x8x32xf32>
    tpu.vector_store %arg4[%c7_75, %c0_76, %c0_77], %269 {strides = array<i32>} : memref<8x8x32xf32, #tpu.memory_space<vmem>>, vector<1x8x32xf32>,
    %c0_78 = arith.constant 0 : index
    %c0_79 = arith.constant 0 : index
    %270 = vector.load %arg5[%c0_78, %c0_79] : memref<8x32xf32, #tpu.memory_space<vmem>>, vector<8x32xf32>
    tpu.vector_store %arg5[%c0_78, %c0_79], %266 {strides = array<i32>} : memref<8x32xf32, #tpu.memory_space<vmem>>, vector<8x32xf32>,
    %c0_80 = arith.constant 0 : index
    %c0_81 = arith.constant 0 : index
    %271 = vector.load %arg6[%c0_80, %c0_81] : memref<8x32xf32, #tpu.memory_space<vmem>>, vector<8x32xf32>
    tpu.vector_store %arg6[%c0_80, %c0_81], %264 {strides = array<i32>} : memref<8x32xf32, #tpu.memory_space<vmem>>, vector<8x32xf32>,
    return
  }
  func.func @transform_0(%arg0: i32, %arg1: i32) -> (i32, i32, i32) {
    %c0_i32 = arith.constant 0 : i32
    %c0_i32_0 = arith.constant 0 : i32
    return %arg1, %arg0, %c0_i32 : i32, i32, i32
  }
  func.func @transform_1(%arg0: i32, %arg1: i32) -> (i32, i32) {
    %c0_i32 = arith.constant 0 : i32
    %c0_i32_0 = arith.constant 0 : i32
    %c0_i32_1 = arith.constant 0 : i32
    return %c0_i32, %c0_i32_0 : i32, i32
  }
  func.func @transform_2(%arg0: i32, %arg1: i32) -> (i32, i32, i32) {
    %c0_i32 = arith.constant 0 : i32
    %c0_i32_0 = arith.constant 0 : i32
    return %arg1, %arg0, %c0_i32 : i32, i32, i32
  }
}

module attributes {stable_mosaic.version = 11 : i64} {
  func.func @_lstm_block_kernel(%arg0: i32, %arg1: i32, %arg2: memref<8x8x128xf32, #tpu.memory_space<vmem>>, %arg3: memref<32x128xbf16, #tpu.memory_space<vmem>>, %arg4: memref<8x8x32xf32, #tpu.memory_space<vmem>>, %arg5: memref<8x32xf32, #tpu.memory_space<vmem>>, %arg6: memref<8x32xf32, #tpu.memory_space<vmem>>) attributes {dimension_semantics = [#tpu.dimension_semantics<parallel>, #tpu.dimension_semantics<arbitrary>], iteration_bounds = array<i64: 1, 1>, scalar_prefetch = 0 : i64, scratch_operands = 2 : i64, tpu.core_type = #tpu.core_type<tc>, window_params = [{transform_indices = @transform_0, window_bounds = array<i64: 8, 8, 128>}, {pipeline_mode = #tpu.pipeline_mode<synchronous>, transform_indices = @transform_1, window_bounds = array<i64: 32, 128>}, {transform_indices = @transform_2, window_bounds = array<i64: 8, 8, 32>}]} {
    %c0_i32 = arith.constant 0 : i32
    %0 = arith.cmpi eq, %arg1, %c0_i32 : i32
    %1 = arith.extui %0 : i1 to i32
    %c0_i32_0 = arith.constant 0 : i32
    %2 = arith.cmpi ne, %1, %c0_i32_0 : i32
    scf.if %2 {
      %cst_82 = arith.constant 0.000000e+00 : f32
      %272 = vector.broadcast %cst_82 : f32 to vector<8x32xf32>
      %c0_83 = arith.constant 0 : index
      %c0_84 = arith.constant 0 : index
      %273 = vector.load %arg5[%c0_83, %c0_84] : memref<8x32xf32, #tpu.memory_space<vmem>>, vector<8x32xf32>
      tpu.vector_store %arg5[%c0_83, %c0_84], %272 {strides = array<i32>} : memref<8x32xf32, #tpu.memory_space<vmem>>, vector<8x32xf32>,
      %cst_85 = arith.constant 0.000000e+00 : f32
      %274 = vector.broadcast %cst_85 : f32 to vector<8x32xf32>
      %c0_86 = arith.constant 0 : index
      %c0_87 = arith.constant 0 : index
      %275 = vector.load %arg6[%c0_86, %c0_87] : memref<8x32xf32, #tpu.memory_space<vmem>>, vector<8x32xf32>
      tpu.vector_store %arg6[%c0_86, %c0_87], %274 {strides = array<i32>} : memref<8x32xf32, #tpu.memory_space<vmem>>, vector<8x32xf32>,
    } else {
    }
    %c0 = arith.constant 0 : index
    %c0_1 = arith.constant 0 : index
    %3 = vector.load %arg3[%c0, %c0_1] : memref<32x128xbf16, #tpu.memory_space<vmem>>, vector<32x128xbf16>
    %c0_2 = arith.constant 0 : index
    %c0_3 = arith.constant 0 : index
    %4 = vector.load %arg5[%c0_2, %c0_3] : memref<8x32xf32, #tpu.memory_space<vmem>>, vector<8x32xf32>
    %c0_4 = arith.constant 0 : index
    %c0_5 = arith.constant 0 : index
    %5 = vector.load %arg6[%c0_4, %c0_5] : memref<8x32xf32, #tpu.memory_space<vmem>>, vector<8x32xf32>
    %c0_6 = arith.constant 0 : index
    %c0_7 = arith.constant 0 : index
    %c0_8 = arith.constant 0 : index
    %6 = vector.load %arg2[%c0_6, %c0_7, %c0_8] : memref<8x8x128xf32, #tpu.memory_space<vmem>>, vector<1x8x128xf32>
    %7 = vector.shape_cast %6 : vector<1x8x128xf32> to vector<8x128xf32>
    %8 = arith.truncf %4 : vector<8x32xf32> to vector<8x32xbf16>
    %cst = arith.constant dense<0.000000e+00> : vector<8x128xf32>
    %9 = tpu.matmul %8, %3, %cst {dimension_numbers = #tpu.dot_dimension_numbers<[1], [0], [0], [1], [0, 0, 1, 1], [], []>} : vector<8x32xbf16>, vector<32x128xbf16>, vector<8x128xf32> -> vector<8x128xf32>
    %10 = arith.addf %7, %9 : vector<8x128xf32>
    %11 = vector.extract_strided_slice %10 {offsets = [0, 0], sizes = [8, 32], strides = [1, 1]} : vector<8x128xf32> to vector<8x32xf32>
    %12 = arith.negf %11 : vector<8x32xf32>
    %13 = math.exp %12 : vector<8x32xf32>
    %cst_9 = arith.constant 1.000000e+00 : f32
    %14 = vector.broadcast %cst_9 : f32 to vector<8x32xf32>
    %15 = arith.addf %14, %13 : vector<8x32xf32>
    %16 = arith.divf %14, %15 : vector<8x32xf32>
    %17 = vector.extract_strided_slice %10 {offsets = [0, 32], sizes = [8, 32], strides = [1, 1]} : vector<8x128xf32> to vector<8x32xf32>
    %18 = arith.negf %17 : vector<8x32xf32>
    %19 = math.exp %18 : vector<8x32xf32>
    %cst_10 = arith.constant 1.000000e+00 : f32
    %20 = vector.broadcast %cst_10 : f32 to vector<8x32xf32>
    %21 = arith.addf %20, %19 : vector<8x32xf32>
    %22 = arith.divf %20, %21 : vector<8x32xf32>
    %23 = vector.extract_strided_slice %10 {offsets = [0, 64], sizes = [8, 32], strides = [1, 1]} : vector<8x128xf32> to vector<8x32xf32>
    %24 = math.tanh %23 : vector<8x32xf32>
    %25 = vector.extract_strided_slice %10 {offsets = [0, 96], sizes = [8, 32], strides = [1, 1]} : vector<8x128xf32> to vector<8x32xf32>
    %26 = arith.negf %25 : vector<8x32xf32>
    %27 = math.exp %26 : vector<8x32xf32>
    %cst_11 = arith.constant 1.000000e+00 : f32
    %28 = vector.broadcast %cst_11 : f32 to vector<8x32xf32>
    %29 = arith.addf %28, %27 : vector<8x32xf32>
    %30 = arith.divf %28, %29 : vector<8x32xf32>
    %31 = arith.mulf %22, %5 : vector<8x32xf32>
    %32 = arith.mulf %16, %24 : vector<8x32xf32>
    %33 = arith.addf %31, %32 : vector<8x32xf32>
    %34 = math.tanh %33 : vector<8x32xf32>
    %35 = arith.mulf %30, %34 : vector<8x32xf32>
    %c0_12 = arith.constant 0 : index
    %c0_13 = arith.constant 0 : index
    %c0_14 = arith.constant 0 : index
    %36 = vector.load %arg4[%c0_12, %c0_13, %c0_14] : memref<8x8x32xf32, #tpu.memory_space<vmem>>, vector<1x8x32xf32>
    %37 = vector.shape_cast %36 : vector<1x8x32xf32> to vector<8x32xf32>
    %38 = vector.shape_cast %35 : vector<8x32xf32> to vector<1x8x32xf32>
    tpu.vector_store %arg4[%c0_12, %c0_13, %c0_14], %38 {strides = array<i32>} : memref<8x8x32xf32, #tpu.memory_space<vmem>>, vector<1x8x32xf32>,
    %c1 = arith.constant 1 : index
    %c0_15 = arith.constant 0 : index
    %c0_16 = arith.constant 0 : index
    %39 = vector.load %arg2[%c1, %c0_15, %c0_16] : memref<8x8x128xf32, #tpu.memory_space<vmem>>, vector<1x8x128xf32>
    %40 = vector.shape_cast %39 : vector<1x8x128xf32> to vector<8x128xf32>
    %41 = arith.truncf %35 : vector<8x32xf32> to vector<8x32xbf16>
    %cst_17 = arith.constant dense<0.000000e+00> : vector<8x128xf32>
    %42 = tpu.matmul %41, %3, %cst_17 {dimension_numbers = #tpu.dot_dimension_numbers<[1], [0], [0], [1], [0, 0, 1, 1], [], []>} : vector<8x32xbf16>, vector<32x128xbf16>, vector<8x128xf32> -> vector<8x128xf32>
    %43 = arith.addf %40, %42 : vector<8x128xf32>
    %44 = vector.extract_strided_slice %43 {offsets = [0, 0], sizes = [8, 32], strides = [1, 1]} : vector<8x128xf32> to vector<8x32xf32>
    %45 = arith.negf %44 : vector<8x32xf32>
    %46 = math.exp %45 : vector<8x32xf32>
    %cst_18 = arith.constant 1.000000e+00 : f32
    %47 = vector.broadcast %cst_18 : f32 to vector<8x32xf32>
    %48 = arith.addf %47, %46 : vector<8x32xf32>
    %49 = arith.divf %47, %48 : vector<8x32xf32>
    %50 = vector.extract_strided_slice %43 {offsets = [0, 32], sizes = [8, 32], strides = [1, 1]} : vector<8x128xf32> to vector<8x32xf32>
    %51 = arith.negf %50 : vector<8x32xf32>
    %52 = math.exp %51 : vector<8x32xf32>
    %cst_19 = arith.constant 1.000000e+00 : f32
    %53 = vector.broadcast %cst_19 : f32 to vector<8x32xf32>
    %54 = arith.addf %53, %52 : vector<8x32xf32>
    %55 = arith.divf %53, %54 : vector<8x32xf32>
    %56 = vector.extract_strided_slice %43 {offsets = [0, 64], sizes = [8, 32], strides = [1, 1]} : vector<8x128xf32> to vector<8x32xf32>
    %57 = math.tanh %56 : vector<8x32xf32>
    %58 = vector.extract_strided_slice %43 {offsets = [0, 96], sizes = [8, 32], strides = [1, 1]} : vector<8x128xf32> to vector<8x32xf32>
    %59 = arith.negf %58 : vector<8x32xf32>
    %60 = math.exp %59 : vector<8x32xf32>
    %cst_20 = arith.constant 1.000000e+00 : f32
    %61 = vector.broadcast %cst_20 : f32 to vector<8x32xf32>
    %62 = arith.addf %61, %60 : vector<8x32xf32>
    %63 = arith.divf %61, %62 : vector<8x32xf32>
    %64 = arith.mulf %55, %33 : vector<8x32xf32>
    %65 = arith.mulf %49, %57 : vector<8x32xf32>
    %66 = arith.addf %64, %65 : vector<8x32xf32>
    %67 = math.tanh %66 : vector<8x32xf32>
    %68 = arith.mulf %63, %67 : vector<8x32xf32>
    %c1_21 = arith.constant 1 : index
    %c0_22 = arith.constant 0 : index
    %c0_23 = arith.constant 0 : index
    %69 = vector.load %arg4[%c1_21, %c0_22, %c0_23] : memref<8x8x32xf32, #tpu.memory_space<vmem>>, vector<1x8x32xf32>
    %70 = vector.shape_cast %69 : vector<1x8x32xf32> to vector<8x32xf32>
    %71 = vector.shape_cast %68 : vector<8x32xf32> to vector<1x8x32xf32>
    tpu.vector_store %arg4[%c1_21, %c0_22, %c0_23], %71 {strides = array<i32>} : memref<8x8x32xf32, #tpu.memory_space<vmem>>, vector<1x8x32xf32>,
    %c2 = arith.constant 2 : index
    %c0_24 = arith.constant 0 : index
    %c0_25 = arith.constant 0 : index
    %72 = vector.load %arg2[%c2, %c0_24, %c0_25] : memref<8x8x128xf32, #tpu.memory_space<vmem>>, vector<1x8x128xf32>
    %73 = vector.shape_cast %72 : vector<1x8x128xf32> to vector<8x128xf32>
    %74 = arith.truncf %68 : vector<8x32xf32> to vector<8x32xbf16>
    %cst_26 = arith.constant dense<0.000000e+00> : vector<8x128xf32>
    %75 = tpu.matmul %74, %3, %cst_26 {dimension_numbers = #tpu.dot_dimension_numbers<[1], [0], [0], [1], [0, 0, 1, 1], [], []>} : vector<8x32xbf16>, vector<32x128xbf16>, vector<8x128xf32> -> vector<8x128xf32>
    %76 = arith.addf %73, %75 : vector<8x128xf32>
    %77 = vector.extract_strided_slice %76 {offsets = [0, 0], sizes = [8, 32], strides = [1, 1]} : vector<8x128xf32> to vector<8x32xf32>
    %78 = arith.negf %77 : vector<8x32xf32>
    %79 = math.exp %78 : vector<8x32xf32>
    %cst_27 = arith.constant 1.000000e+00 : f32
    %80 = vector.broadcast %cst_27 : f32 to vector<8x32xf32>
    %81 = arith.addf %80, %79 : vector<8x32xf32>
    %82 = arith.divf %80, %81 : vector<8x32xf32>
    %83 = vector.extract_strided_slice %76 {offsets = [0, 32], sizes = [8, 32], strides = [1, 1]} : vector<8x128xf32> to vector<8x32xf32>
    %84 = arith.negf %83 : vector<8x32xf32>
    %85 = math.exp %84 : vector<8x32xf32>
    %cst_28 = arith.constant 1.000000e+00 : f32
    %86 = vector.broadcast %cst_28 : f32 to vector<8x32xf32>
    %87 = arith.addf %86, %85 : vector<8x32xf32>
    %88 = arith.divf %86, %87 : vector<8x32xf32>
    %89 = vector.extract_strided_slice %76 {offsets = [0, 64], sizes = [8, 32], strides = [1, 1]} : vector<8x128xf32> to vector<8x32xf32>
    %90 = math.tanh %89 : vector<8x32xf32>
    %91 = vector.extract_strided_slice %76 {offsets = [0, 96], sizes = [8, 32], strides = [1, 1]} : vector<8x128xf32> to vector<8x32xf32>
    %92 = arith.negf %91 : vector<8x32xf32>
    %93 = math.exp %92 : vector<8x32xf32>
    %cst_29 = arith.constant 1.000000e+00 : f32
    %94 = vector.broadcast %cst_29 : f32 to vector<8x32xf32>
    %95 = arith.addf %94, %93 : vector<8x32xf32>
    %96 = arith.divf %94, %95 : vector<8x32xf32>
    %97 = arith.mulf %88, %66 : vector<8x32xf32>
    %98 = arith.mulf %82, %90 : vector<8x32xf32>
    %99 = arith.addf %97, %98 : vector<8x32xf32>
    %100 = math.tanh %99 : vector<8x32xf32>
    %101 = arith.mulf %96, %100 : vector<8x32xf32>
    %c2_30 = arith.constant 2 : index
    %c0_31 = arith.constant 0 : index
    %c0_32 = arith.constant 0 : index
    %102 = vector.load %arg4[%c2_30, %c0_31, %c0_32] : memref<8x8x32xf32, #tpu.memory_space<vmem>>, vector<1x8x32xf32>
    %103 = vector.shape_cast %102 : vector<1x8x32xf32> to vector<8x32xf32>
    %104 = vector.shape_cast %101 : vector<8x32xf32> to vector<1x8x32xf32>
    tpu.vector_store %arg4[%c2_30, %c0_31, %c0_32], %104 {strides = array<i32>} : memref<8x8x32xf32, #tpu.memory_space<vmem>>, vector<1x8x32xf32>,
    %c3 = arith.constant 3 : index
    %c0_33 = arith.constant 0 : index
    %c0_34 = arith.constant 0 : index
    %105 = vector.load %arg2[%c3, %c0_33, %c0_34] : memref<8x8x128xf32, #tpu.memory_space<vmem>>, vector<1x8x128xf32>
    %106 = vector.shape_cast %105 : vector<1x8x128xf32> to vector<8x128xf32>
    %107 = arith.truncf %101 : vector<8x32xf32> to vector<8x32xbf16>
    %cst_35 = arith.constant dense<0.000000e+00> : vector<8x128xf32>
    %108 = tpu.matmul %107, %3, %cst_35 {dimension_numbers = #tpu.dot_dimension_numbers<[1], [0], [0], [1], [0, 0, 1, 1], [], []>} : vector<8x32xbf16>, vector<32x128xbf16>, vector<8x128xf32> -> vector<8x128xf32>
    %109 = arith.addf %106, %108 : vector<8x128xf32>
    %110 = vector.extract_strided_slice %109 {offsets = [0, 0], sizes = [8, 32], strides = [1, 1]} : vector<8x128xf32> to vector<8x32xf32>
    %111 = arith.negf %110 : vector<8x32xf32>
    %112 = math.exp %111 : vector<8x32xf32>
    %cst_36 = arith.constant 1.000000e+00 : f32
    %113 = vector.broadcast %cst_36 : f32 to vector<8x32xf32>
    %114 = arith.addf %113, %112 : vector<8x32xf32>
    %115 = arith.divf %113, %114 : vector<8x32xf32>
    %116 = vector.extract_strided_slice %109 {offsets = [0, 32], sizes = [8, 32], strides = [1, 1]} : vector<8x128xf32> to vector<8x32xf32>
    %117 = arith.negf %116 : vector<8x32xf32>
    %118 = math.exp %117 : vector<8x32xf32>
    %cst_37 = arith.constant 1.000000e+00 : f32
    %119 = vector.broadcast %cst_37 : f32 to vector<8x32xf32>
    %120 = arith.addf %119, %118 : vector<8x32xf32>
    %121 = arith.divf %119, %120 : vector<8x32xf32>
    %122 = vector.extract_strided_slice %109 {offsets = [0, 64], sizes = [8, 32], strides = [1, 1]} : vector<8x128xf32> to vector<8x32xf32>
    %123 = math.tanh %122 : vector<8x32xf32>
    %124 = vector.extract_strided_slice %109 {offsets = [0, 96], sizes = [8, 32], strides = [1, 1]} : vector<8x128xf32> to vector<8x32xf32>
    %125 = arith.negf %124 : vector<8x32xf32>
    %126 = math.exp %125 : vector<8x32xf32>
    %cst_38 = arith.constant 1.000000e+00 : f32
    %127 = vector.broadcast %cst_38 : f32 to vector<8x32xf32>
    %128 = arith.addf %127, %126 : vector<8x32xf32>
    %129 = arith.divf %127, %128 : vector<8x32xf32>
    %130 = arith.mulf %121, %99 : vector<8x32xf32>
    %131 = arith.mulf %115, %123 : vector<8x32xf32>
    %132 = arith.addf %130, %131 : vector<8x32xf32>
    %133 = math.tanh %132 : vector<8x32xf32>
    %134 = arith.mulf %129, %133 : vector<8x32xf32>
    %c3_39 = arith.constant 3 : index
    %c0_40 = arith.constant 0 : index
    %c0_41 = arith.constant 0 : index
    %135 = vector.load %arg4[%c3_39, %c0_40, %c0_41] : memref<8x8x32xf32, #tpu.memory_space<vmem>>, vector<1x8x32xf32>
    %136 = vector.shape_cast %135 : vector<1x8x32xf32> to vector<8x32xf32>
    %137 = vector.shape_cast %134 : vector<8x32xf32> to vector<1x8x32xf32>
    tpu.vector_store %arg4[%c3_39, %c0_40, %c0_41], %137 {strides = array<i32>} : memref<8x8x32xf32, #tpu.memory_space<vmem>>, vector<1x8x32xf32>,
    %c4 = arith.constant 4 : index
    %c0_42 = arith.constant 0 : index
    %c0_43 = arith.constant 0 : index
    %138 = vector.load %arg2[%c4, %c0_42, %c0_43] : memref<8x8x128xf32, #tpu.memory_space<vmem>>, vector<1x8x128xf32>
    %139 = vector.shape_cast %138 : vector<1x8x128xf32> to vector<8x128xf32>
    %140 = arith.truncf %134 : vector<8x32xf32> to vector<8x32xbf16>
    %cst_44 = arith.constant dense<0.000000e+00> : vector<8x128xf32>
    %141 = tpu.matmul %140, %3, %cst_44 {dimension_numbers = #tpu.dot_dimension_numbers<[1], [0], [0], [1], [0, 0, 1, 1], [], []>} : vector<8x32xbf16>, vector<32x128xbf16>, vector<8x128xf32> -> vector<8x128xf32>
    %142 = arith.addf %139, %141 : vector<8x128xf32>
    %143 = vector.extract_strided_slice %142 {offsets = [0, 0], sizes = [8, 32], strides = [1, 1]} : vector<8x128xf32> to vector<8x32xf32>
    %144 = arith.negf %143 : vector<8x32xf32>
    %145 = math.exp %144 : vector<8x32xf32>
    %cst_45 = arith.constant 1.000000e+00 : f32
    %146 = vector.broadcast %cst_45 : f32 to vector<8x32xf32>
    %147 = arith.addf %146, %145 : vector<8x32xf32>
    %148 = arith.divf %146, %147 : vector<8x32xf32>
    %149 = vector.extract_strided_slice %142 {offsets = [0, 32], sizes = [8, 32], strides = [1, 1]} : vector<8x128xf32> to vector<8x32xf32>
    %150 = arith.negf %149 : vector<8x32xf32>
    %151 = math.exp %150 : vector<8x32xf32>
    %cst_46 = arith.constant 1.000000e+00 : f32
    %152 = vector.broadcast %cst_46 : f32 to vector<8x32xf32>
    %153 = arith.addf %152, %151 : vector<8x32xf32>
    %154 = arith.divf %152, %153 : vector<8x32xf32>
    %155 = vector.extract_strided_slice %142 {offsets = [0, 64], sizes = [8, 32], strides = [1, 1]} : vector<8x128xf32> to vector<8x32xf32>
    %156 = math.tanh %155 : vector<8x32xf32>
    %157 = vector.extract_strided_slice %142 {offsets = [0, 96], sizes = [8, 32], strides = [1, 1]} : vector<8x128xf32> to vector<8x32xf32>
    %158 = arith.negf %157 : vector<8x32xf32>
    %159 = math.exp %158 : vector<8x32xf32>
    %cst_47 = arith.constant 1.000000e+00 : f32
    %160 = vector.broadcast %cst_47 : f32 to vector<8x32xf32>
    %161 = arith.addf %160, %159 : vector<8x32xf32>
    %162 = arith.divf %160, %161 : vector<8x32xf32>
    %163 = arith.mulf %154, %132 : vector<8x32xf32>
    %164 = arith.mulf %148, %156 : vector<8x32xf32>
    %165 = arith.addf %163, %164 : vector<8x32xf32>
    %166 = math.tanh %165 : vector<8x32xf32>
    %167 = arith.mulf %162, %166 : vector<8x32xf32>
    %c4_48 = arith.constant 4 : index
    %c0_49 = arith.constant 0 : index
    %c0_50 = arith.constant 0 : index
    %168 = vector.load %arg4[%c4_48, %c0_49, %c0_50] : memref<8x8x32xf32, #tpu.memory_space<vmem>>, vector<1x8x32xf32>
    %169 = vector.shape_cast %168 : vector<1x8x32xf32> to vector<8x32xf32>
    %170 = vector.shape_cast %167 : vector<8x32xf32> to vector<1x8x32xf32>
    tpu.vector_store %arg4[%c4_48, %c0_49, %c0_50], %170 {strides = array<i32>} : memref<8x8x32xf32, #tpu.memory_space<vmem>>, vector<1x8x32xf32>,
    %c5 = arith.constant 5 : index
    %c0_51 = arith.constant 0 : index
    %c0_52 = arith.constant 0 : index
    %171 = vector.load %arg2[%c5, %c0_51, %c0_52] : memref<8x8x128xf32, #tpu.memory_space<vmem>>, vector<1x8x128xf32>
    %172 = vector.shape_cast %171 : vector<1x8x128xf32> to vector<8x128xf32>
    %173 = arith.truncf %167 : vector<8x32xf32> to vector<8x32xbf16>
    %cst_53 = arith.constant dense<0.000000e+00> : vector<8x128xf32>
    %174 = tpu.matmul %173, %3, %cst_53 {dimension_numbers = #tpu.dot_dimension_numbers<[1], [0], [0], [1], [0, 0, 1, 1], [], []>} : vector<8x32xbf16>, vector<32x128xbf16>, vector<8x128xf32> -> vector<8x128xf32>
    %175 = arith.addf %172, %174 : vector<8x128xf32>
    %176 = vector.extract_strided_slice %175 {offsets = [0, 0], sizes = [8, 32], strides = [1, 1]} : vector<8x128xf32> to vector<8x32xf32>
    %177 = arith.negf %176 : vector<8x32xf32>
    %178 = math.exp %177 : vector<8x32xf32>
    %cst_54 = arith.constant 1.000000e+00 : f32
    %179 = vector.broadcast %cst_54 : f32 to vector<8x32xf32>
    %180 = arith.addf %179, %178 : vector<8x32xf32>
    %181 = arith.divf %179, %180 : vector<8x32xf32>
    %182 = vector.extract_strided_slice %175 {offsets = [0, 32], sizes = [8, 32], strides = [1, 1]} : vector<8x128xf32> to vector<8x32xf32>
    %183 = arith.negf %182 : vector<8x32xf32>
    %184 = math.exp %183 : vector<8x32xf32>
    %cst_55 = arith.constant 1.000000e+00 : f32
    %185 = vector.broadcast %cst_55 : f32 to vector<8x32xf32>
    %186 = arith.addf %185, %184 : vector<8x32xf32>
    %187 = arith.divf %185, %186 : vector<8x32xf32>
    %188 = vector.extract_strided_slice %175 {offsets = [0, 64], sizes = [8, 32], strides = [1, 1]} : vector<8x128xf32> to vector<8x32xf32>
    %189 = math.tanh %188 : vector<8x32xf32>
    %190 = vector.extract_strided_slice %175 {offsets = [0, 96], sizes = [8, 32], strides = [1, 1]} : vector<8x128xf32> to vector<8x32xf32>
    %191 = arith.negf %190 : vector<8x32xf32>
    %192 = math.exp %191 : vector<8x32xf32>
    %cst_56 = arith.constant 1.000000e+00 : f32
    %193 = vector.broadcast %cst_56 : f32 to vector<8x32xf32>
    %194 = arith.addf %193, %192 : vector<8x32xf32>
    %195 = arith.divf %193, %194 : vector<8x32xf32>
    %196 = arith.mulf %187, %165 : vector<8x32xf32>
    %197 = arith.mulf %181, %189 : vector<8x32xf32>
    %198 = arith.addf %196, %197 : vector<8x32xf32>
    %199 = math.tanh %198 : vector<8x32xf32>
    %200 = arith.mulf %195, %199 : vector<8x32xf32>
    %c5_57 = arith.constant 5 : index
    %c0_58 = arith.constant 0 : index
    %c0_59 = arith.constant 0 : index
    %201 = vector.load %arg4[%c5_57, %c0_58, %c0_59] : memref<8x8x32xf32, #tpu.memory_space<vmem>>, vector<1x8x32xf32>
    %202 = vector.shape_cast %201 : vector<1x8x32xf32> to vector<8x32xf32>
    %203 = vector.shape_cast %200 : vector<8x32xf32> to vector<1x8x32xf32>
    tpu.vector_store %arg4[%c5_57, %c0_58, %c0_59], %203 {strides = array<i32>} : memref<8x8x32xf32, #tpu.memory_space<vmem>>, vector<1x8x32xf32>,
    %c6 = arith.constant 6 : index
    %c0_60 = arith.constant 0 : index
    %c0_61 = arith.constant 0 : index
    %204 = vector.load %arg2[%c6, %c0_60, %c0_61] : memref<8x8x128xf32, #tpu.memory_space<vmem>>, vector<1x8x128xf32>
    %205 = vector.shape_cast %204 : vector<1x8x128xf32> to vector<8x128xf32>
    %206 = arith.truncf %200 : vector<8x32xf32> to vector<8x32xbf16>
    %cst_62 = arith.constant dense<0.000000e+00> : vector<8x128xf32>
    %207 = tpu.matmul %206, %3, %cst_62 {dimension_numbers = #tpu.dot_dimension_numbers<[1], [0], [0], [1], [0, 0, 1, 1], [], []>} : vector<8x32xbf16>, vector<32x128xbf16>, vector<8x128xf32> -> vector<8x128xf32>
    %208 = arith.addf %205, %207 : vector<8x128xf32>
    %209 = vector.extract_strided_slice %208 {offsets = [0, 0], sizes = [8, 32], strides = [1, 1]} : vector<8x128xf32> to vector<8x32xf32>
    %210 = arith.negf %209 : vector<8x32xf32>
    %211 = math.exp %210 : vector<8x32xf32>
    %cst_63 = arith.constant 1.000000e+00 : f32
    %212 = vector.broadcast %cst_63 : f32 to vector<8x32xf32>
    %213 = arith.addf %212, %211 : vector<8x32xf32>
    %214 = arith.divf %212, %213 : vector<8x32xf32>
    %215 = vector.extract_strided_slice %208 {offsets = [0, 32], sizes = [8, 32], strides = [1, 1]} : vector<8x128xf32> to vector<8x32xf32>
    %216 = arith.negf %215 : vector<8x32xf32>
    %217 = math.exp %216 : vector<8x32xf32>
    %cst_64 = arith.constant 1.000000e+00 : f32
    %218 = vector.broadcast %cst_64 : f32 to vector<8x32xf32>
    %219 = arith.addf %218, %217 : vector<8x32xf32>
    %220 = arith.divf %218, %219 : vector<8x32xf32>
    %221 = vector.extract_strided_slice %208 {offsets = [0, 64], sizes = [8, 32], strides = [1, 1]} : vector<8x128xf32> to vector<8x32xf32>
    %222 = math.tanh %221 : vector<8x32xf32>
    %223 = vector.extract_strided_slice %208 {offsets = [0, 96], sizes = [8, 32], strides = [1, 1]} : vector<8x128xf32> to vector<8x32xf32>
    %224 = arith.negf %223 : vector<8x32xf32>
    %225 = math.exp %224 : vector<8x32xf32>
    %cst_65 = arith.constant 1.000000e+00 : f32
    %226 = vector.broadcast %cst_65 : f32 to vector<8x32xf32>
    %227 = arith.addf %226, %225 : vector<8x32xf32>
    %228 = arith.divf %226, %227 : vector<8x32xf32>
    %229 = arith.mulf %220, %198 : vector<8x32xf32>
    %230 = arith.mulf %214, %222 : vector<8x32xf32>
    %231 = arith.addf %229, %230 : vector<8x32xf32>
    %232 = math.tanh %231 : vector<8x32xf32>
    %233 = arith.mulf %228, %232 : vector<8x32xf32>
    %c6_66 = arith.constant 6 : index
    %c0_67 = arith.constant 0 : index
    %c0_68 = arith.constant 0 : index
    %234 = vector.load %arg4[%c6_66, %c0_67, %c0_68] : memref<8x8x32xf32, #tpu.memory_space<vmem>>, vector<1x8x32xf32>
    %235 = vector.shape_cast %234 : vector<1x8x32xf32> to vector<8x32xf32>
    %236 = vector.shape_cast %233 : vector<8x32xf32> to vector<1x8x32xf32>
    tpu.vector_store %arg4[%c6_66, %c0_67, %c0_68], %236 {strides = array<i32>} : memref<8x8x32xf32, #tpu.memory_space<vmem>>, vector<1x8x32xf32>,
    %c7 = arith.constant 7 : index
    %c0_69 = arith.constant 0 : index
    %c0_70 = arith.constant 0 : index
    %237 = vector.load %arg2[%c7, %c0_69, %c0_70] : memref<8x8x128xf32, #tpu.memory_space<vmem>>, vector<1x8x128xf32>
    %238 = vector.shape_cast %237 : vector<1x8x128xf32> to vector<8x128xf32>
    %239 = arith.truncf %233 : vector<8x32xf32> to vector<8x32xbf16>
    %cst_71 = arith.constant dense<0.000000e+00> : vector<8x128xf32>
    %240 = tpu.matmul %239, %3, %cst_71 {dimension_numbers = #tpu.dot_dimension_numbers<[1], [0], [0], [1], [0, 0, 1, 1], [], []>} : vector<8x32xbf16>, vector<32x128xbf16>, vector<8x128xf32> -> vector<8x128xf32>
    %241 = arith.addf %238, %240 : vector<8x128xf32>
    %242 = vector.extract_strided_slice %241 {offsets = [0, 0], sizes = [8, 32], strides = [1, 1]} : vector<8x128xf32> to vector<8x32xf32>
    %243 = arith.negf %242 : vector<8x32xf32>
    %244 = math.exp %243 : vector<8x32xf32>
    %cst_72 = arith.constant 1.000000e+00 : f32
    %245 = vector.broadcast %cst_72 : f32 to vector<8x32xf32>
    %246 = arith.addf %245, %244 : vector<8x32xf32>
    %247 = arith.divf %245, %246 : vector<8x32xf32>
    %248 = vector.extract_strided_slice %241 {offsets = [0, 32], sizes = [8, 32], strides = [1, 1]} : vector<8x128xf32> to vector<8x32xf32>
    %249 = arith.negf %248 : vector<8x32xf32>
    %250 = math.exp %249 : vector<8x32xf32>
    %cst_73 = arith.constant 1.000000e+00 : f32
    %251 = vector.broadcast %cst_73 : f32 to vector<8x32xf32>
    %252 = arith.addf %251, %250 : vector<8x32xf32>
    %253 = arith.divf %251, %252 : vector<8x32xf32>
    %254 = vector.extract_strided_slice %241 {offsets = [0, 64], sizes = [8, 32], strides = [1, 1]} : vector<8x128xf32> to vector<8x32xf32>
    %255 = math.tanh %254 : vector<8x32xf32>
    %256 = vector.extract_strided_slice %241 {offsets = [0, 96], sizes = [8, 32], strides = [1, 1]} : vector<8x128xf32> to vector<8x32xf32>
    %257 = arith.negf %256 : vector<8x32xf32>
    %258 = math.exp %257 : vector<8x32xf32>
    %cst_74 = arith.constant 1.000000e+00 : f32
    %259 = vector.broadcast %cst_74 : f32 to vector<8x32xf32>
    %260 = arith.addf %259, %258 : vector<8x32xf32>
    %261 = arith.divf %259, %260 : vector<8x32xf32>
    %262 = arith.mulf %253, %231 : vector<8x32xf32>
    %263 = arith.mulf %247, %255 : vector<8x32xf32>
    %264 = arith.addf %262, %263 : vector<8x32xf32>
    %265 = math.tanh %264 : vector<8x32xf32>
    %266 = arith.mulf %261, %265 : vector<8x32xf32>
    %c7_75 = arith.constant 7 : index
    %c0_76 = arith.constant 0 : index
    %c0_77 = arith.constant 0 : index
    %267 = vector.load %arg4[%c7_75, %c0_76, %c0_77] : memref<8x8x32xf32, #tpu.memory_space<vmem>>, vector<1x8x32xf32>
    %268 = vector.shape_cast %267 : vector<1x8x32xf32> to vector<8x32xf32>
    %269 = vector.shape_cast %266 : vector<8x32xf32> to vector<1x8x32xf32>
    tpu.vector_store %arg4[%c7_75, %c0_76, %c0_77], %269 {strides = array<i32>} : memref<8x8x32xf32, #tpu.memory_space<vmem>>, vector<1x8x32xf32>,
    %c0_78 = arith.constant 0 : index
    %c0_79 = arith.constant 0 : index
    %270 = vector.load %arg5[%c0_78, %c0_79] : memref<8x32xf32, #tpu.memory_space<vmem>>, vector<8x32xf32>
    tpu.vector_store %arg5[%c0_78, %c0_79], %266 {strides = array<i32>} : memref<8x32xf32, #tpu.memory_space<vmem>>, vector<8x32xf32>,
    %c0_80 = arith.constant 0 : index
    %c0_81 = arith.constant 0 : index
    %271 = vector.load %arg6[%c0_80, %c0_81] : memref<8x32xf32, #tpu.memory_space<vmem>>, vector<8x32xf32>
    tpu.vector_store %arg6[%c0_80, %c0_81], %264 {strides = array<i32>} : memref<8x32xf32, #tpu.memory_space<vmem>>, vector<8x32xf32>,
    return
  }
  func.func @transform_0(%arg0: i32, %arg1: i32) -> (i32, i32, i32) {
    %c0_i32 = arith.constant 0 : i32
    %c0_i32_0 = arith.constant 0 : i32
    return %arg1, %arg0, %c0_i32 : i32, i32, i32
  }
  func.func @transform_1(%arg0: i32, %arg1: i32) -> (i32, i32) {
    %c0_i32 = arith.constant 0 : i32
    %c0_i32_0 = arith.constant 0 : i32
    %c0_i32_1 = arith.constant 0 : i32
    return %c0_i32, %c0_i32_0 : i32, i32
  }
  func.func @transform_2(%arg0: i32, %arg1: i32) -> (i32, i32, i32) {
    %c0_i32 = arith.constant 0 : i32
    %c0_i32_0 = arith.constant 0 : i32
    return %arg1, %arg0, %c0_i32 : i32, i32, i32
  }
}

module attributes {stable_mosaic.version = 11 : i64} {
  func.func @_input_proj_kernel(%arg0: i32, %arg1: memref<64x32xf32, #tpu.memory_space<vmem>>, %arg2: memref<32x128xbf16, #tpu.memory_space<vmem>>, %arg3: memref<1x128xf32, #tpu.memory_space<vmem>>, %arg4: memref<64x128xf32, #tpu.memory_space<vmem>>) attributes {dimension_semantics = [#tpu.dimension_semantics<parallel>], iteration_bounds = array<i64: 1>, scalar_prefetch = 0 : i64, scratch_operands = 0 : i64, tpu.core_type = #tpu.core_type<tc>, window_params = [{transform_indices = @transform_0, window_bounds = array<i64: 64, 32>}, {pipeline_mode = #tpu.pipeline_mode<synchronous>, transform_indices = @transform_1, window_bounds = array<i64: 32, 128>}, {pipeline_mode = #tpu.pipeline_mode<synchronous>, transform_indices = @transform_2, window_bounds = array<i64: 1, 128>}, {transform_indices = @transform_3, window_bounds = array<i64: 64, 128>}]} {
    %c0 = arith.constant 0 : index
    %c0_0 = arith.constant 0 : index
    %0 = vector.load %arg1[%c0, %c0_0] : memref<64x32xf32, #tpu.memory_space<vmem>>, vector<64x32xf32>
    %1 = arith.truncf %0 : vector<64x32xf32> to vector<64x32xbf16>
    %c0_1 = arith.constant 0 : index
    %c0_2 = arith.constant 0 : index
    %2 = vector.load %arg2[%c0_1, %c0_2] : memref<32x128xbf16, #tpu.memory_space<vmem>>, vector<32x128xbf16>
    %cst = arith.constant dense<0.000000e+00> : vector<64x128xf32>
    %3 = tpu.matmul %1, %2, %cst {dimension_numbers = #tpu.dot_dimension_numbers<[1], [0], [0], [1], [0, 0, 1, 1], [], []>} : vector<64x32xbf16>, vector<32x128xbf16>, vector<64x128xf32> -> vector<64x128xf32>
    %c0_3 = arith.constant 0 : index
    %c0_4 = arith.constant 0 : index
    %4 = vector.load %arg3[%c0_3, %c0_4] : memref<1x128xf32, #tpu.memory_space<vmem>>, vector<1x128xf32>
    %5 = vector.broadcast %4 : vector<1x128xf32> to vector<64x128xf32>
    %6 = arith.addf %3, %5 : vector<64x128xf32>
    %c0_5 = arith.constant 0 : index
    %c0_6 = arith.constant 0 : index
    %7 = vector.load %arg4[%c0_5, %c0_6] : memref<64x128xf32, #tpu.memory_space<vmem>>, vector<64x128xf32>
    tpu.vector_store %arg4[%c0_5, %c0_6], %6 {strides = array<i32>} : memref<64x128xf32, #tpu.memory_space<vmem>>, vector<64x128xf32>,
    return
  }
  func.func @transform_0(%arg0: i32) -> (i32, i32) {
    %c0_i32 = arith.constant 0 : i32
    %c0_i32_0 = arith.constant 0 : i32
    return %arg0, %c0_i32 : i32, i32
  }
  func.func @transform_1(%arg0: i32) -> (i32, i32) {
    %c0_i32 = arith.constant 0 : i32
    %c0_i32_0 = arith.constant 0 : i32
    %c0_i32_1 = arith.constant 0 : i32
    return %c0_i32, %c0_i32_0 : i32, i32
  }
  func.func @transform_2(%arg0: i32) -> (i32, i32) {
    %c0_i32 = arith.constant 0 : i32
    %c0_i32_0 = arith.constant 0 : i32
    %c0_i32_1 = arith.constant 0 : i32
    return %c0_i32, %c0_i32_0 : i32, i32
  }
  func.func @transform_3(%arg0: i32) -> (i32, i32) {
    %c0_i32 = arith.constant 0 : i32
    %c0_i32_0 = arith.constant 0 : i32
    return %arg0, %c0_i32 : i32, i32
  }
}

</mosaic_0001>

<llo_original>
// kernel: single_rnn_lstm.2
$region0: #{single_rnn_lstm.2}
  #allocation0 [shape = 'u32[]', space=smem, size = 0x4, offset = 0x4, fixed_abs, tag = 'smem constant byte address 0x4 - core index']
  #allocation1 [shape = 'u32[72,128]{1,0:T(1,128)}', space=vmem, size = 0x9000, scoped, tag = 'internal scratch']
  %s0 = inlined_call_operand.vmem [shape: f32[64,32], index: 0, kind: input, shape index: {}]
  %s1 = inlined_call_operand.vmem [shape: bf16[32,128], index: 1, kind: input, shape index: {}]
  %s2 = inlined_call_operand.vmem [shape: f32[1,128], index: 2, kind: input, shape index: {}]
  %s3 = inlined_call_operand.vmem [shape: f32[64,128], index: 3, kind: output, shape index: {}]
  %s4 = sld [smem:[#allocation0]]
  $region22: #{single_rnn_lstm.2} parent=0
    _
  %s6 = ssub.s32 1, %s4
  %s7 = scalar_select 0, %s6, %s4
  // Predicated region
  $region2: #{single_rnn_lstm.2} parent=0 // pred_check
    _
  $region3: #{single_rnn_lstm.2} parent=0 // pred_check_branch
    %9 = sbr.rel (0) target = $region5
  $region4: #{single_rnn_lstm.2} parent=0 // pred_region
    _
  $region5: #{single_rnn_lstm.2} parent=0 // pred_fallthru
    _
  // Predicated region
  $region6: #{single_rnn_lstm.2} parent=0 // pred_check
    _
  $region7: #{single_rnn_lstm.2} parent=0 // pred_check_branch
    %11 = sbr.rel (0) target = $region9
  $region8: #{single_rnn_lstm.2} parent=0 // pred_region
    _
  $region9: #{single_rnn_lstm.2} parent=0 // pred_fallthru
    _
  // Predicated region
  $region10: #{single_rnn_lstm.2} parent=0 // pred_check
    _
  $region11: #{single_rnn_lstm.2} parent=0 // pred_check_branch
    %13 = sbr.rel (0) target = $region13
  $region12: #{single_rnn_lstm.2} parent=0 // pred_region
    _
  $region13: #{single_rnn_lstm.2} parent=0 // pred_fallthru
    _
  %v15 = vld [vmem:[%s0] sm:$0xff]
  %v16 = vld [vmem:[%s0 + $0x8] sm:$0xff]
  %v17 = vld [vmem:[%s0 + $0x10] sm:$0xff]
  %v18 = vld [vmem:[%s0 + $0x18] sm:$0xff]
  %v19 = vld [vmem:[%s0 + $0x20] sm:$0xff]
  %v20 = vld [vmem:[%s0 + $0x28] sm:$0xff]
  %v21 = vld [vmem:[%s0 + $0x30] sm:$0xff]
  %v22 = vld [vmem:[%s0 + $0x38] sm:$0xff]
  %v23 = vpack.c.bf16 %v16, %v15
  %v24 = vpack.c.bf16 %v18, %v17
  %v25 = vpack.c.bf16 %v20, %v19
  %v26 = vpack.c.bf16 %v22, %v21
  %v27 = vld [vmem:[%s1] sm:$0xf]
  %v28 = vld [vmem:[%s1 + $0x4] sm:$0xf]
  %v29 = vld [vmem:[%s1 + $0x8] sm:$0xf]
  %v30 = vld [vmem:[%s1 + $0xc] sm:$0xf]
  %v31 = vld [vmem:[%s2] sm:$0x1]
  %v33 = vperm.slane %v31, 0
  %v39 = vunpack.c.l.b16 %v27
  %v40 = vunpack.c.l.b16 %v28
  %v41 = vunpack.c.l.b16 %v29
  %v42 = vunpack.c.l.b16 %v30
  %v43 = vpack.c.b16 %v40, %v39
  %v44 = vpack.c.b16 %v42, %v41
  %vm47 = vcmask 261120
  %v49 = vsel %vm47, %v23, 0
  %v52 = vsel %vm47, %v24, 0
  %v55 = vsel %vm47, %v25, 0
  %v58 = vsel %vm47, %v26, 0
  %60 = vmatpush.bf16.msra.mxu0 0
  %61 = vmatpush.bf16.msra.mxu0 0
  %62 = vmatpush.bf16.msra.mxu0 0
  %63 = vmatpush.bf16.msra.mxu0 0
  %64 = vmatpush.bf16.msra.mxu0 0
  %65 = vmatpush.bf16.msra.mxu0 0
  %66 = vmatpush.bf16.msra.mxu0 %v44
  %67 = vmatpush.bf16.msra.mxu0 %v43
  %68 = vmatmul.bf16.gmra.mxu0 %v49
  %v69 = vpop.f32.mrf.mxu0
  %v70 = vadd.f32 %v33, %v69
  %v71 = vpop.f32.mrf.mxu0
  %v72 = vadd.f32 %v33, %v71
  %73 = vmatmul.bf16.gmra.mxu0 %v52
  %v74 = vpop.f32.mrf.mxu0
  %v75 = vadd.f32 %v33, %v74
  %v76 = vpop.f32.mrf.mxu0
  %v77 = vadd.f32 %v33, %v76
  %78 = vmatmul.bf16.gmra.mxu0 %v55
  %v79 = vpop.f32.mrf.mxu0
  %v80 = vadd.f32 %v33, %v79
  %v81 = vpop.f32.mrf.mxu0
  %v82 = vadd.f32 %v33, %v81
  %83 = vmatmul.bf16.gmra.mxu0 %v58
  %v84 = vpop.f32.mrf.mxu0
  %v85 = vadd.f32 %v33, %v84
  %v86 = vpop.f32.mrf.mxu0
  %v87 = vadd.f32 %v33, %v86
  %88 = vdwg.mxu0
  %89 = vst [vmem:[%s3] sm:$0xff] %v70
  %90 = vst [vmem:[%s3 + $0x8] sm:$0xff] %v72
  %91 = vst [vmem:[%s3 + $0x10] sm:$0xff] %v75
  %92 = vst [vmem:[%s3 + $0x18] sm:$0xff] %v77
  %93 = vst [vmem:[%s3 + $0x20] sm:$0xff] %v80
  %94 = vst [vmem:[%s3 + $0x28] sm:$0xff] %v82
  %95 = vst [vmem:[%s3 + $0x30] sm:$0xff] %v85
  %96 = vst [vmem:[%s3 + $0x38] sm:$0xff] %v87
  // Predicated region
  $region14: #{single_rnn_lstm.2} parent=0 // pred_check
    _
  $region15: #{single_rnn_lstm.2} parent=0 // pred_check_branch
    %98 = sbr.rel (0) target = $region17
  $region16: #{single_rnn_lstm.2} parent=0 // pred_region
    _
  $region17: #{single_rnn_lstm.2} parent=0 // pred_fallthru
    _
  // Predicated region
  $region18: #{single_rnn_lstm.2} parent=0 // pred_check
    _
  $region19: #{single_rnn_lstm.2} parent=0 // pred_check_branch
    %100 = sbr.rel (0) target = $region21
  $region20: #{single_rnn_lstm.2} parent=0 // pred_region
    _
  $region21: #{single_rnn_lstm.2} parent=0 // pred_fallthru
    _

// kernel: single_rnn_lstm.3
$region0: #{single_rnn_lstm.3}
  #allocation0 [shape = 'u32[]', space=smem, size = 0x4, offset = 0x4, fixed_abs, tag = 'smem constant byte address 0x4 - core index']
  #allocation1 [shape = 'u32[72,128]{1,0:T(1,128)}', space=vmem, size = 0x9000, scoped, tag = 'internal scratch']
  #allocation2 [shape = 'f32[8,32]{1,0:T(8,128)}', space=vmem, size = 0x1000, scoped, tag = 'scratch operand']
  #allocation3 [shape = 'f32[8,32]{1,0:T(8,128)}', space=vmem, size = 0x1000, scoped, tag = 'scratch operand']
  %s0 = inlined_call_operand.vmem [shape: f32[8,8,128], index: 0, kind: input, shape index: {}]
  %s1 = inlined_call_operand.vmem [shape: bf16[32,128], index: 1, kind: input, shape index: {}]
  %s2 = inlined_call_operand.vmem [shape: f32[8,8,32], index: 2, kind: output, shape index: {}]
  %s3 = sld [smem:[#allocation0]]
  $region22: #{single_rnn_lstm.3} parent=0
    _
  %s5 = ssub.s32 1, %s3
  %s6 = scalar_select 0, %s5, %s3
  // Predicated region
  $region2: #{single_rnn_lstm.3} parent=0 // pred_check
    _
  $region3: #{single_rnn_lstm.3} parent=0 // pred_check_branch
    %8 = sbr.rel (0) target = $region5
  $region4: #{single_rnn_lstm.3} parent=0 // pred_region
    _
  $region5: #{single_rnn_lstm.3} parent=0 // pred_fallthru
    _
  // Predicated region
  $region6: #{single_rnn_lstm.3} parent=0 // pred_check
    _
  $region7: #{single_rnn_lstm.3} parent=0 // pred_check_branch
    %10 = sbr.rel (0) target = $region9
  $region8: #{single_rnn_lstm.3} parent=0 // pred_region
    _
  $region9: #{single_rnn_lstm.3} parent=0 // pred_fallthru
    _
  %p12 = scmp.eq.s32.totalorder 0, 0
  // Predicated region
  $region10: #{single_rnn_lstm.3} parent=0 // pred_check
    %p13 = pneg %p12
  $region11: #{single_rnn_lstm.3} parent=0 // pred_check_branch
    %15 = sbr.rel (%p13) target = $region13
  $region12: #{single_rnn_lstm.3} parent=0 // pred_region
    %vm16 = vcmask 261120
    %17 = vst.msk [vmem:[#allocation2] sm:$0xff] %vm16, 0.0
    %18 = vst.msk [vmem:[#allocation3] sm:$0xff] %vm16, 0.0
  $region13: #{single_rnn_lstm.3} parent=0 // pred_fallthru
    _
  %v19 = vld [vmem:[%s1] sm:$0xf]
  %v20 = vld [vmem:[%s1 + $0x4] sm:$0xf]
  %v21 = vld [vmem:[%s1 + $0x8] sm:$0xf]
  %v22 = vld [vmem:[%s1 + $0xc] sm:$0xf]
  %v23 = vld [vmem:[#allocation2] sm:$0xff]
  %v24 = vld [vmem:[#allocation3] sm:$0xff]
  %v25 = vld [vmem:[%s0] sm:$0xff]
  %v26 = vpack.c.bf16 %v23, %v23
  %v31 = vunpack.c.l.b16 %v19
  %v32 = vunpack.c.l.b16 %v20
  %v33 = vunpack.c.l.b16 %v21
  %v34 = vunpack.c.l.b16 %v22
  %v35 = vpack.c.b16 %v32, %v31
  %v36 = vpack.c.b16 %v34, %v33
  %vm39 = vcmask 261120
  %v41 = vsel %vm39, %v26, 0
  %43 = vmatpush.bf16.msra.mxu0 0
  %44 = vmatpush.bf16.msra.mxu0 0
  %45 = vmatpush.bf16.msra.mxu0 0
  %46 = vmatpush.bf16.msra.mxu0 0
  %47 = vmatpush.bf16.msra.mxu0 0
  %48 = vmatpush.bf16.msra.mxu0 0
  %49 = vmatpush.bf16.msra.mxu0 %v36
  %50 = vmatpush.bf16.msra.mxu0 %v35
  %51 = vmatmul.bf16.gmra.mxu0 %v41
  %v52 = vpop.f32.mrf.mxu0
  %v53 = vadd.f32 0.0, %v52
  %v54 = vpop.f32.mrf.mxu0
  %55 = vdwg.mxu0
  %v56 = vadd.f32 %v25, %v53
  %v57 = vxor.u32 %v56, 2147483648
  %v58 = vmul.f32 %v57, 1.442695
  %v59 = vpow.pop %v58
  %v60 = vadd.f32 %v59, 1.0
  %v61 = vrcp.pop %v60
  %v62 = vmul.f32 %v60, %v61
  %v63 = vsub.f32 1.0, %v62
  %v64 = vmul.f32 %v61, %v63
  %v65 = vadd.f32 %v61, %v64
  %vm66 = vweird.f32 %v60
  %vm67 = vweird.f32 %v61
  %vm68 = vmor %vm66, %vm67
  %v69 = vsel %vm68, %v61, %v65
  %v70 = vand.u32 2147483647, %v60
  %vm71 = vcmp.eq.f32.partialorder %v70, 8.507059e+37
  %v72 = vand.u32 %v60, 2147483648
  %v73 = vor.u32 1.1754944e-38, %v72
  %v74 = vsel %vm71, %v73, %v69
  %v75 = vmul.f32 1.0, %v74
  %v76 = vtanh.pop %v56
  %78 = vrot.lane.b32.xlu0 %v24, 32
  %v79 = vpop.permute.xlu0 %78
  %v81 = vmul.f32 %v75, %v79
  %83 = vrot.lane.b32.xlu0 %v76, 64
  %v84 = vpop.permute.xlu0 %83
  %v86 = vmul.f32 %v75, %v84
  %88 = vrot.lane.b32.xlu0 %v86, 32
  %v89 = vpop.permute.xlu0 %88
  %v91 = vadd.f32 %v81, %v89
  %v92 = vtanh.pop %v91
  %94 = vrot.lane.b32.xlu0 %v92, 64
  %v95 = vpop.permute.xlu0 %94
  %v97 = vmul.f32 %v75, %v95
  %99 = vrot.lane.b32.xlu0 %v97, 32
  %v100 = vpop.permute.xlu0 %99
  %102 = vst.msk [vmem:[%s2] sm:$0xff] %vm39, %v100
  %s103 = scalar_lea.vmem %s0, 8
  %v104 = vld [vmem:[%s103] sm:$0xff]
  %v105 = vpack.c.bf16 %v97, %v97
  %107 = vrot.lane.b32.xlu0 %v105, 32
  %v108 = vpop.permute.xlu0 %107
  %v110 = vsel %vm39, %v108, 0
  %112 = vmatpush.bf16.msra.mxu0 0
  %113 = vmatpush.bf16.msra.mxu0 0
  %114 = vmatpush.bf16.msra.mxu0 0
  %115 = vmatpush.bf16.msra.mxu0 0
  %116 = vmatpush.bf16.msra.mxu0 0
  %117 = vmatpush.bf16.msra.mxu0 0
  %118 = vmatpush.bf16.msra.mxu0 %v36
  %119 = vmatpush.bf16.msra.mxu0 %v35
  %120 = vmatmul.bf16.gmra.mxu0 %v110
  %v121 = vpop.f32.mrf.mxu0
  %v122 = vadd.f32 0.0, %v121
  %v123 = vpop.f32.mrf.mxu0
  %124 = vdwg.mxu0
  %v125 = vadd.f32 %v104, %v122
  %v126 = vxor.u32 %v125, 2147483648
  %v127 = vmul.f32 %v126, 1.442695
  %v128 = vpow.pop %v127
  %v129 = vadd.f32 %v128, 1.0
  %v130 = vrcp.pop %v129
  %v131 = vmul.f32 %v129, %v130
  %v132 = vsub.f32 1.0, %v131
  %v133 = vmul.f32 %v130, %v132
  %v134 = vadd.f32 %v130, %v133
  %vm135 = vweird.f32 %v129
  %vm136 = vweird.f32 %v130
  %vm137 = vmor %vm135, %vm136
  %v138 = vsel %vm137, %v130, %v134
  %v139 = vand.u32 2147483647, %v129
  %vm140 = vcmp.eq.f32.partialorder %v139, 8.507059e+37
  %v141 = vand.u32 %v129, 2147483648
  %v142 = vor.u32 1.1754944e-38, %v141
  %v143 = vsel %vm140, %v142, %v138
  %v144 = vmul.f32 1.0, %v143
  %v145 = vtanh.pop %v125
  %v146 = vmul.f32 %v144, %v91
  %148 = vrot.lane.b32.xlu0 %v145, 64
  %v149 = vpop.permute.xlu0 %148
  %v151 = vmul.f32 %v144, %v149
  %153 = vrot.lane.b32.xlu0 %v151, 32
  %v154 = vpop.permute.xlu0 %153
  %v156 = vadd.f32 %v146, %v154
  %v157 = vtanh.pop %v156
  %159 = vrot.lane.b32.xlu0 %v157, 64
  %v160 = vpop.permute.xlu0 %159
  %v162 = vmul.f32 %v144, %v160
  %164 = vrot.lane.b32.xlu0 %v162, 32
  %v165 = vpop.permute.xlu0 %164
  %s167 = scalar_lea.vmem %s2, 8
  %168 = vst.msk [vmem:[%s167] sm:$0xff] %vm39, %v165
  %s169 = scalar_lea.vmem %s0, 16
  %v170 = vld [vmem:[%s169] sm:$0xff]
  %v171 = vpack.c.bf16 %v162, %v162
  %173 = vrot.lane.b32.xlu0 %v171, 32
  %v174 = vpop.permute.xlu0 %173
  %v176 = vsel %vm39, %v174, 0
  %178 = vmatpush.bf16.msra.mxu0 0
  %179 = vmatpush.bf16.msra.mxu0 0
  %180 = vmatpush.bf16.msra.mxu0 0
  %181 = vmatpush.bf16.msra.mxu0 0
  %182 = vmatpush.bf16.msra.mxu0 0
  %183 = vmatpush.bf16.msra.mxu0 0
  %184 = vmatpush.bf16.msra.mxu0 %v36
  %185 = vmatpush.bf16.msra.mxu0 %v35
  %186 = vmatmul.bf16.gmra.mxu0 %v176
  %v187 = vpop.f32.mrf.mxu0
  %v188 = vadd.f32 0.0, %v187
  %v189 = vpop.f32.mrf.mxu0
  %190 = vdwg.mxu0
  %v191 = vadd.f32 %v170, %v188
  %v192 = vxor.u32 %v191, 2147483648
  %v193 = vmul.f32 %v192, 1.442695
  %v194 = vpow.pop %v193
  %v195 = vadd.f32 %v194, 1.0
  %v196 = vrcp.pop %v195
  %v197 = vmul.f32 %v195, %v196
  %v198 = vsub.f32 1.0, %v197
  %v199 = vmul.f32 %v196, %v198
  %v200 = vadd.f32 %v196, %v199
  %vm201 = vweird.f32 %v195
  %vm202 = vweird.f32 %v196
  %vm203 = vmor %vm201, %vm202
  %v204 = vsel %vm203, %v196, %v200
  %v205 = vand.u32 2147483647, %v195
  %vm206 = vcmp.eq.f32.partialorder %v205, 8.507059e+37
  %v207 = vand.u32 %v195, 2147483648
  %v208 = vor.u32 1.1754944e-38, %v207
  %v209 = vsel %vm206, %v208, %v204
  %v210 = vmul.f32 1.0, %v209
  %v211 = vtanh.pop %v191
  %v212 = vmul.f32 %v210, %v156
  %214 = vrot.lane.b32.xlu0 %v211, 64
  %v215 = vpop.permute.xlu0 %214
  %v217 = vmul.f32 %v210, %v215
  %219 = vrot.lane.b32.xlu0 %v217, 32
  %v220 = vpop.permute.xlu0 %219
  %v222 = vadd.f32 %v212, %v220
  %v223 = vtanh.pop %v222
  %225 = vrot.lane.b32.xlu0 %v223, 64
  %v226 = vpop.permute.xlu0 %225
  %v228 = vmul.f32 %v210, %v226
  %230 = vrot.lane.b32.xlu0 %v228, 32
  %v231 = vpop.permute.xlu0 %230
  %s233 = scalar_lea.vmem %s2, 16
  %234 = vst.msk [vmem:[%s233] sm:$0xff] %vm39, %v231
  %s235 = scalar_lea.vmem %s0, 24
  %v236 = vld [vmem:[%s235] sm:$0xff]
  %v237 = vpack.c.bf16 %v228, %v228
  %239 = vrot.lane.b32.xlu0 %v237, 32
  %v240 = vpop.permute.xlu0 %239
  %v242 = vsel %vm39, %v240, 0
  %244 = vmatpush.bf16.msra.mxu0 0
  %245 = vmatpush.bf16.msra.mxu0 0
  %246 = vmatpush.bf16.msra.mxu0 0
  %247 = vmatpush.bf16.msra.mxu0 0
  %248 = vmatpush.bf16.msra.mxu0 0
  %249 = vmatpush.bf16.msra.mxu0 0
  %250 = vmatpush.bf16.msra.mxu0 %v36
  %251 = vmatpush.bf16.msra.mxu0 %v35
  %252 = vmatmul.bf16.gmra.mxu0 %v242
  %v253 = vpop.f32.mrf.mxu0
  %v254 = vadd.f32 0.0, %v253
  %v255 = vpop.f32.mrf.mxu0
  %256 = vdwg.mxu0
  %v257 = vadd.f32 %v236, %v254
  %v258 = vxor.u32 %v257, 2147483648
  %v259 = vmul.f32 %v258, 1.442695
  %v260 = vpow.pop %v259
  %v261 = vadd.f32 %v260, 1.0
  %v262 = vrcp.pop %v261
  %v263 = vmul.f32 %v261, %v262
  %v264 = vsub.f32 1.0, %v263
  %v265 = vmul.f32 %v262, %v264
  %v266 = vadd.f32 %v262, %v265
  %vm267 = vweird.f32 %v261
  %vm268 = vweird.f32 %v262
  %vm269 = vmor %vm267, %vm268
  %v270 = vsel %vm269, %v262, %v266
  %v271 = vand.u32 2147483647, %v261
  %vm272 = vcmp.eq.f32.partialorder %v271, 8.507059e+37
  %v273 = vand.u32 %v261, 2147483648
  %v274 = vor.u32 1.1754944e-38, %v273
  %v275 = vsel %vm272, %v274, %v270
  %v276 = vmul.f32 1.0, %v275
  %v277 = vtanh.pop %v257
  %v278 = vmul.f32 %v276, %v222
  %280 = vrot.lane.b32.xlu0 %v277, 64
  %v281 = vpop.permute.xlu0 %280
  %v283 = vmul.f32 %v276, %v281
  %285 = vrot.lane.b32.xlu0 %v283, 32
  %v286 = vpop.permute.xlu0 %285
  %v288 = vadd.f32 %v278, %v286
  %v289 = vtanh.pop %v288
  %291 = vrot.lane.b32.xlu0 %v289, 64
  %v292 = vpop.permute.xlu0 %291
  %v294 = vmul.f32 %v276, %v292
  %296 = vrot.lane.b32.xlu0 %v294, 32
  %v297 = vpop.permute.xlu0 %296
  %s299 = scalar_lea.vmem %s2, 24
  %300 = vst.msk [vmem:[%s299] sm:$0xff] %vm39, %v297
  %s301 = scalar_lea.vmem %s0, 32
  %v302 = vld [vmem:[%s301] sm:$0xff]
  %v303 = vpack.c.bf16 %v294, %v294
  %305 = vrot.lane.b32.xlu0 %v303, 32
  %v306 = vpop.permute.xlu0 %305
  %v308 = vsel %vm39, %v306, 0
  %310 = vmatpush.bf16.msra.mxu0 0
  %311 = vmatpush.bf16.msra.mxu0 0
  %312 = vmatpush.bf16.msra.mxu0 0
  %313 = vmatpush.bf16.msra.mxu0 0
  %314 = vmatpush.bf16.msra.mxu0 0
  %315 = vmatpush.bf16.msra.mxu0 0
  %316 = vmatpush.bf16.msra.mxu0 %v36
  %317 = vmatpush.bf16.msra.mxu0 %v35
  %318 = vmatmul.bf16.gmra.mxu0 %v308
  %v319 = vpop.f32.mrf.mxu0
  %v320 = vadd.f32 0.0, %v319
  %v321 = vpop.f32.mrf.mxu0
  %322 = vdwg.mxu0
  %v323 = vadd.f32 %v302, %v320
  %v324 = vxor.u32 %v323, 2147483648
  %v325 = vmul.f32 %v324, 1.442695
  %v326 = vpow.pop %v325
  %v327 = vadd.f32 %v326, 1.0
  %v328 = vrcp.pop %v327
  %v329 = vmul.f32 %v327, %v328
  %v330 = vsub.f32 1.0, %v329
  %v331 = vmul.f32 %v328, %v330
  %v332 = vadd.f32 %v328, %v331
  %vm333 = vweird.f32 %v327
  %vm334 = vweird.f32 %v328
  %vm335 = vmor %vm333, %vm334
  %v336 = vsel %vm335, %v328, %v332
  %v337 = vand.u32 2147483647, %v327
  %vm338 = vcmp.eq.f32.partialorder %v337, 8.507059e+37
  %v339 = vand.u32 %v327, 2147483648
  %v340 = vor.u32 1.1754944e-38, %v339
  %v341 = vsel %vm338, %v340, %v336
  %v342 = vmul.f32 1.0, %v341
  %v343 = vtanh.pop %v323
  %v344 = vmul.f32 %v342, %v288
  %346 = vrot.lane.b32.xlu0 %v343, 64
  %v347 = vpop.permute.xlu0 %346
  %v349 = vmul.f32 %v342, %v347
  %351 = vrot.lane.b32.xlu0 %v349, 32
  %v352 = vpop.permute.xlu0 %351
  %v354 = vadd.f32 %v344, %v352
  %v355 = vtanh.pop %v354
  %357 = vrot.lane.b32.xlu0 %v355, 64
  %v358 = vpop.permute.xlu0 %357
  %v360 = vmul.f32 %v342, %v358
  %362 = vrot.lane.b32.xlu0 %v360, 32
  %v363 = vpop.permute.xlu0 %362
  %s365 = scalar_lea.vmem %s2, 32
  %366 = vst.msk [vmem:[%s365] sm:$0xff] %vm39, %v363
  %s367 = scalar_lea.vmem %s0, 40
  %v368 = vld [vmem:[%s367] sm:$0xff]
  %v369 = vpack.c.bf16 %v360, %v360
  %371 = vrot.lane.b32.xlu0 %v369, 32
  %v372 = vpop.permute.xlu0 %371
  %v374 = vsel %vm39, %v372, 0
  %376 = vmatpush.bf16.msra.mxu0 0
  %377 = vmatpush.bf16.msra.mxu0 0
  %378 = vmatpush.bf16.msra.mxu0 0
  %379 = vmatpush.bf16.msra.mxu0 0
  %380 = vmatpush.bf16.msra.mxu0 0
  %381 = vmatpush.bf16.msra.mxu0 0
  %382 = vmatpush.bf16.msra.mxu0 %v36
  %383 = vmatpush.bf16.msra.mxu0 %v35
  %384 = vmatmul.bf16.gmra.mxu0 %v374
  %v385 = vpop.f32.mrf.mxu0
  %v386 = vadd.f32 0.0, %v385
  %v387 = vpop.f32.mrf.mxu0
  %388 = vdwg.mxu0
  %v389 = vadd.f32 %v368, %v386
  %v390 = vxor.u32 %v389, 2147483648
  %v391 = vmul.f32 %v390, 1.442695
  %v392 = vpow.pop %v391
  %v393 = vadd.f32 %v392, 1.0
  %v394 = vrcp.pop %v393
  %v395 = vmul.f32 %v393, %v394
  %v396 = vsub.f32 1.0, %v395
  %v397 = vmul.f32 %v394, %v396
  %v398 = vadd.f32 %v394, %v397
  %vm399 = vweird.f32 %v393
  %vm400 = vweird.f32 %v394
  %vm401 = vmor %vm399, %vm400
  %v402 = vsel %vm401, %v394, %v398
  %v403 = vand.u32 2147483647, %v393
  %vm404 = vcmp.eq.f32.partialorder %v403, 8.507059e+37
  %v405 = vand.u32 %v393, 2147483648
  %v406 = vor.u32 1.1754944e-38, %v405
  %v407 = vsel %vm404, %v406, %v402
  %v408 = vmul.f32 1.0, %v407
  %v409 = vtanh.pop %v389
  %v410 = vmul.f32 %v408, %v354
  %412 = vrot.lane.b32.xlu0 %v409, 64
  %v413 = vpop.permute.xlu0 %412
  %v415 = vmul.f32 %v408, %v413
  %417 = vrot.lane.b32.xlu0 %v415, 32
  %v418 = vpop.permute.xlu0 %417
  %v420 = vadd.f32 %v410, %v418
  %v421 = vtanh.pop %v420
  %423 = vrot.lane.b32.xlu0 %v421, 64
  %v424 = vpop.permute.xlu0 %423
  %v426 = vmul.f32 %v408, %v424
  %428 = vrot.lane.b32.xlu0 %v426, 32
  %v429 = vpop.permute.xlu0 %428
  %s431 = scalar_lea.vmem %s2, 40
  %432 = vst.msk [vmem:[%s431] sm:$0xff] %vm39, %v429
  %s433 = scalar_lea.vmem %s0, 48
  %v434 = vld [vmem:[%s433] sm:$0xff]
  %v435 = vpack.c.bf16 %v426, %v426
  %437 = vrot.lane.b32.xlu0 %v435, 32
  %v438 = vpop.permute.xlu0 %437
  %v440 = vsel %vm39, %v438, 0
  %442 = vmatpush.bf16.msra.mxu0 0
  %443 = vmatpush.bf16.msra.mxu0 0
  %444 = vmatpush.bf16.msra.mxu0 0
  %445 = vmatpush.bf16.msra.mxu0 0
  %446 = vmatpush.bf16.msra.mxu0 0
  %447 = vmatpush.bf16.msra.mxu0 0
  %448 = vmatpush.bf16.msra.mxu0 %v36
  %449 = vmatpush.bf16.msra.mxu0 %v35
  %450 = vmatmul.bf16.gmra.mxu0 %v440
  %v451 = vpop.f32.mrf.mxu0
  %v452 = vadd.f32 0.0, %v451
  %v453 = vpop.f32.mrf.mxu0
  %454 = vdwg.mxu0
  %v455 = vadd.f32 %v434, %v452
  %v456 = vxor.u32 %v455, 2147483648
  %v457 = vmul.f32 %v456, 1.442695
  %v458 = vpow.pop %v457
  %v459 = vadd.f32 %v458, 1.0
  %v460 = vrcp.pop %v459
  %v461 = vmul.f32 %v459, %v460
  %v462 = vsub.f32 1.0, %v461
  %v463 = vmul.f32 %v460, %v462
  %v464 = vadd.f32 %v460, %v463
  %vm465 = vweird.f32 %v459
  %vm466 = vweird.f32 %v460
  %vm467 = vmor %vm465, %vm466
  %v468 = vsel %vm467, %v460, %v464
  %v469 = vand.u32 2147483647, %v459
  %vm470 = vcmp.eq.f32.partialorder %v469, 8.507059e+37
  %v471 = vand.u32 %v459, 2147483648
  %v472 = vor.u32 1.1754944e-38, %v471
  %v473 = vsel %vm470, %v472, %v468
  %v474 = vmul.f32 1.0, %v473
  %v475 = vtanh.pop %v455
  %v476 = vmul.f32 %v474, %v420
  %478 = vrot.lane.b32.xlu0 %v475, 64
  %v479 = vpop.permute.xlu0 %478
  %v481 = vmul.f32 %v474, %v479
  %483 = vrot.lane.b32.xlu0 %v481, 32
  %v484 = vpop.permute.xlu0 %483
  %v486 = vadd.f32 %v476, %v484
  %v487 = vtanh.pop %v486
  %489 = vrot.lane.b32.xlu0 %v487, 64
  %v490 = vpop.permute.xlu0 %489
  %v492 = vmul.f32 %v474, %v490
  %494 = vrot.lane.b32.xlu0 %v492, 32
  %v495 = vpop.permute.xlu0 %494
  %s497 = scalar_lea.vmem %s2, 48
  %498 = vst.msk [vmem:[%s497] sm:$0xff] %vm39, %v495
  %s499 = scalar_lea.vmem %s0, 56
  %v500 = vld [vmem:[%s499] sm:$0xff]
  %v501 = vpack.c.bf16 %v492, %v492
  %503 = vrot.lane.b32.xlu0 %v501, 32
  %v504 = vpop.permute.xlu0 %503
  %v506 = vsel %vm39, %v504, 0
  %508 = vmatpush.bf16.msra.mxu0 0
  %509 = vmatpush.bf16.msra.mxu0 0
  %510 = vmatpush.bf16.msra.mxu0 0
  %511 = vmatpush.bf16.msra.mxu0 0
  %512 = vmatpush.bf16.msra.mxu0 0
  %513 = vmatpush.bf16.msra.mxu0 0
  %514 = vmatpush.bf16.msra.mxu0 %v36
  %515 = vmatpush.bf16.msra.mxu0 %v35
  %516 = vmatmul.bf16.gmra.mxu0 %v506
  %v517 = vpop.f32.mrf.mxu0
  %v518 = vadd.f32 0.0, %v517
  %v519 = vpop.f32.mrf.mxu0
  %520 = vdwg.mxu0
  %v521 = vadd.f32 %v500, %v518
  %v522 = vxor.u32 %v521, 2147483648
  %v523 = vmul.f32 %v522, 1.442695
  %v524 = vpow.pop %v523
  %v525 = vadd.f32 %v524, 1.0
  %v526 = vrcp.pop %v525
  %v527 = vmul.f32 %v525, %v526
  %v528 = vsub.f32 1.0, %v527
  %v529 = vmul.f32 %v526, %v528
  %v530 = vadd.f32 %v526, %v529
  %vm531 = vweird.f32 %v525
  %vm532 = vweird.f32 %v526
  %vm533 = vmor %vm531, %vm532
  %v534 = vsel %vm533, %v526, %v530
  %v535 = vand.u32 2147483647, %v525
  %vm536 = vcmp.eq.f32.partialorder %v535, 8.507059e+37
  %v537 = vand.u32 %v525, 2147483648
  %v538 = vor.u32 1.1754944e-38, %v537
  %v539 = vsel %vm536, %v538, %v534
  %v540 = vmul.f32 1.0, %v539
  %v541 = vtanh.pop %v521
  %v542 = vmul.f32 %v540, %v486
  %544 = vrot.lane.b32.xlu0 %v541, 64
  %v545 = vpop.permute.xlu0 %544
  %v547 = vmul.f32 %v540, %v545
  %549 = vrot.lane.b32.xlu0 %v547, 32
  %v550 = vpop.permute.xlu0 %549
  %v552 = vadd.f32 %v542, %v550
  %v553 = vtanh.pop %v552
  %555 = vrot.lane.b32.xlu0 %v553, 64
  %v556 = vpop.permute.xlu0 %555
  %v558 = vmul.f32 %v540, %v556
  %560 = vrot.lane.b32.xlu0 %v558, 32
  %v561 = vpop.permute.xlu0 %560
  %s563 = scalar_lea.vmem %s2, 56
  %564 = vst.msk [vmem:[%s563] sm:$0xff] %vm39, %v561
  %565 = vst.msk [vmem:[#allocation2] sm:$0xff] %vm39, %v561
  %567 = vrot.lane.b32.xlu0 %v552, 96
  %v568 = vpop.permute.xlu0 %567
  %570 = vst.msk [vmem:[#allocation3] sm:$0xff] %vm39, %v568
  // Predicated region
  $region14: #{single_rnn_lstm.3} parent=0 // pred_check
    _
  $region15: #{single_rnn_lstm.3} parent=0 // pred_check_branch
    %572 = sbr.rel (0) target = $region17
  $region16: #{single_rnn_lstm.3} parent=0 // pred_region
    _
  $region17: #{single_rnn_lstm.3} parent=0 // pred_fallthru
    _
  // Predicated region
  $region18: #{single_rnn_lstm.3} parent=0 // pred_check
    _
  $region19: #{single_rnn_lstm.3} parent=0 // pred_check_branch
    %574 = sbr.rel (0) target = $region21
  $region20: #{single_rnn_lstm.3} parent=0 // pred_region
    _
  $region21: #{single_rnn_lstm.3} parent=0 // pred_fallthru
    _

// kernel: single_rnn_lstm.2
$region0: #{single_rnn_lstm.2}
  #allocation0 [shape = 'u32[]', space=smem, size = 0x4, offset = 0x4, fixed_abs, tag = 'smem constant byte address 0x4 - core index']
  #allocation1 [shape = 'u32[72,128]{1,0:T(1,128)}', space=vmem, size = 0x9000, scoped, tag = 'internal scratch']
  %s0 = inlined_call_operand.vmem [shape: f32[64,32], index: 0, kind: input, shape index: {}]
  %s1 = inlined_call_operand.vmem [shape: bf16[32,128], index: 1, kind: input, shape index: {}]
  %s2 = inlined_call_operand.vmem [shape: f32[1,128], index: 2, kind: input, shape index: {}]
  %s3 = inlined_call_operand.vmem [shape: f32[64,128], index: 3, kind: output, shape index: {}]
  %s4 = sld [smem:[#allocation0]]
  $region22: #{single_rnn_lstm.2} parent=0
    _
  %s6 = ssub.s32 1, %s4
  %s7 = scalar_select 0, %s6, %s4
  // Predicated region
  $region2: #{single_rnn_lstm.2} parent=0 // pred_check
    _
  $region3: #{single_rnn_lstm.2} parent=0 // pred_check_branch
    %9 = sbr.rel (0) target = $region5
  $region4: #{single_rnn_lstm.2} parent=0 // pred_region
    _
  $region5: #{single_rnn_lstm.2} parent=0 // pred_fallthru
    _
  // Predicated region
  $region6: #{single_rnn_lstm.2} parent=0 // pred_check
    _
  $region7: #{single_rnn_lstm.2} parent=0 // pred_check_branch
    %11 = sbr.rel (0) target = $region9
  $region8: #{single_rnn_lstm.2} parent=0 // pred_region
    _
  $region9: #{single_rnn_lstm.2} parent=0 // pred_fallthru
    _
  // Predicated region
  $region10: #{single_rnn_lstm.2} parent=0 // pred_check
    _
  $region11: #{single_rnn_lstm.2} parent=0 // pred_check_branch
    %13 = sbr.rel (0) target = $region13
  $region12: #{single_rnn_lstm.2} parent=0 // pred_region
    _
  $region13: #{single_rnn_lstm.2} parent=0 // pred_fallthru
    _
  %v15 = vld [vmem:[%s0] sm:$0xff]
  %v16 = vld [vmem:[%s0 + $0x8] sm:$0xff]
  %v17 = vld [vmem:[%s0 + $0x10] sm:$0xff]
  %v18 = vld [vmem:[%s0 + $0x18] sm:$0xff]
  %v19 = vld [vmem:[%s0 + $0x20] sm:$0xff]
  %v20 = vld [vmem:[%s0 + $0x28] sm:$0xff]
  %v21 = vld [vmem:[%s0 + $0x30] sm:$0xff]
  %v22 = vld [vmem:[%s0 + $0x38] sm:$0xff]
  %v23 = vpack.c.bf16 %v16, %v15
  %v24 = vpack.c.bf16 %v18, %v17
  %v25 = vpack.c.bf16 %v20, %v19
  %v26 = vpack.c.bf16 %v22, %v21
  %v27 = vld [vmem:[%s1] sm:$0xf]
  %v28 = vld [vmem:[%s1 + $0x4] sm:$0xf]
  %v29 = vld [vmem:[%s1 + $0x8] sm:$0xf]
  %v30 = vld [vmem:[%s1 + $0xc] sm:$0xf]
  %v31 = vld [vmem:[%s2] sm:$0x1]
  %v33 = vperm.slane %v31, 0
  %v39 = vunpack.c.l.b16 %v27
  %v40 = vunpack.c.l.b16 %v28
  %v41 = vunpack.c.l.b16 %v29
  %v42 = vunpack.c.l.b16 %v30
  %v43 = vpack.c.b16 %v40, %v39
  %v44 = vpack.c.b16 %v42, %v41
  %vm47 = vcmask 261120
  %v49 = vsel %vm47, %v23, 0
  %v52 = vsel %vm47, %v24, 0
  %v55 = vsel %vm47, %v25, 0
  %v58 = vsel %vm47, %v26, 0
  %60 = vmatpush.bf16.msra.mxu0 0
  %61 = vmatpush.bf16.msra.mxu0 0
  %62 = vmatpush.bf16.msra.mxu0 0
  %63 = vmatpush.bf16.msra.mxu0 0
  %64 = vmatpush.bf16.msra.mxu0 0
  %65 = vmatpush.bf16.msra.mxu0 0
  %66 = vmatpush.bf16.msra.mxu0 %v44
  %67 = vmatpush.bf16.msra.mxu0 %v43
  %68 = vmatmul.bf16.gmra.mxu0 %v49
  %v69 = vpop.f32.mrf.mxu0
  %v70 = vadd.f32 %v33, %v69
  %v71 = vpop.f32.mrf.mxu0
  %v72 = vadd.f32 %v33, %v71
  %73 = vmatmul.bf16.gmra.mxu0 %v52
  %v74 = vpop.f32.mrf.mxu0
  %v75 = vadd.f32 %v33, %v74
  %v76 = vpop.f32.mrf.mxu0
  %v77 = vadd.f32 %v33, %v76
  %78 = vmatmul.bf16.gmra.mxu0 %v55
  %v79 = vpop.f32.mrf.mxu0
  %v80 = vadd.f32 %v33, %v79
  %v81 = vpop.f32.mrf.mxu0
  %v82 = vadd.f32 %v33, %v81
  %83 = vmatmul.bf16.gmra.mxu0 %v58
  %v84 = vpop.f32.mrf.mxu0
  %v85 = vadd.f32 %v33, %v84
  %v86 = vpop.f32.mrf.mxu0
  %v87 = vadd.f32 %v33, %v86
  %88 = vdwg.mxu0
  %89 = vst [vmem:[%s3] sm:$0xff] %v70
  %90 = vst [vmem:[%s3 + $0x8] sm:$0xff] %v72
  %91 = vst [vmem:[%s3 + $0x10] sm:$0xff] %v75
  %92 = vst [vmem:[%s3 + $0x18] sm:$0xff] %v77
  %93 = vst [vmem:[%s3 + $0x20] sm:$0xff] %v80
  %94 = vst [vmem:[%s3 + $0x28] sm:$0xff] %v82
  %95 = vst [vmem:[%s3 + $0x30] sm:$0xff] %v85
  %96 = vst [vmem:[%s3 + $0x38] sm:$0xff] %v87
  // Predicated region
  $region14: #{single_rnn_lstm.2} parent=0 // pred_check
    _
  $region15: #{single_rnn_lstm.2} parent=0 // pred_check_branch
    %98 = sbr.rel (0) target = $region17
  $region16: #{single_rnn_lstm.2} parent=0 // pred_region
    _
  $region17: #{single_rnn_lstm.2} parent=0 // pred_fallthru
    _
  // Predicated region
  $region18: #{single_rnn_lstm.2} parent=0 // pred_check
    _
  $region19: #{single_rnn_lstm.2} parent=0 // pred_check_branch
    %100 = sbr.rel (0) target = $region21
  $region20: #{single_rnn_lstm.2} parent=0 // pred_region
    _
  $region21: #{single_rnn_lstm.2} parent=0 // pred_fallthru
    _

// kernel: single_rnn_lstm.3
$region0: #{single_rnn_lstm.3}
  #allocation0 [shape = 'u32[]', space=smem, size = 0x4, offset = 0x4, fixed_abs, tag = 'smem constant byte address 0x4 - core index']
  #allocation1 [shape = 'u32[72,128]{1,0:T(1,128)}', space=vmem, size = 0x9000, scoped, tag = 'internal scratch']
  #allocation2 [shape = 'f32[8,32]{1,0:T(8,128)}', space=vmem, size = 0x1000, scoped, tag = 'scratch operand']
  #allocation3 [shape = 'f32[8,32]{1,0:T(8,128)}', space=vmem, size = 0x1000, scoped, tag = 'scratch operand']
  %s0 = inlined_call_operand.vmem [shape: f32[8,8,128], index: 0, kind: input, shape index: {}]
  %s1 = inlined_call_operand.vmem [shape: bf16[32,128], index: 1, kind: input, shape index: {}]
  %s2 = inlined_call_operand.vmem [shape: f32[8,8,32], index: 2, kind: output, shape index: {}]
  %s3 = sld [smem:[#allocation0]]
  $region22: #{single_rnn_lstm.3} parent=0
    _
  %s5 = ssub.s32 1, %s3
  %s6 = scalar_select 0, %s5, %s3
  // Predicated region
  $region2: #{single_rnn_lstm.3} parent=0 // pred_check
    _
  $region3: #{single_rnn_lstm.3} parent=0 // pred_check_branch
    %8 = sbr.rel (0) target = $region5
  $region4: #{single_rnn_lstm.3} parent=0 // pred_region
    _
  $region5: #{single_rnn_lstm.3} parent=0 // pred_fallthru
    _
  // Predicated region
  $region6: #{single_rnn_lstm.3} parent=0 // pred_check
    _
  $region7: #{single_rnn_lstm.3} parent=0 // pred_check_branch
    %10 = sbr.rel (0) target = $region9
  $region8: #{single_rnn_lstm.3} parent=0 // pred_region
    _
  $region9: #{single_rnn_lstm.3} parent=0 // pred_fallthru
    _
  %p12 = scmp.eq.s32.totalorder 0, 0
  // Predicated region
  $region10: #{single_rnn_lstm.3} parent=0 // pred_check
    %p13 = pneg %p12
  $region11: #{single_rnn_lstm.3} parent=0 // pred_check_branch
    %15 = sbr.rel (%p13) target = $region13
  $region12: #{single_rnn_lstm.3} parent=0 // pred_region
    %vm16 = vcmask 261120
    %17 = vst.msk [vmem:[#allocation2] sm:$0xff] %vm16, 0.0
    %18 = vst.msk [vmem:[#allocation3] sm:$0xff] %vm16, 0.0
  $region13: #{single_rnn_lstm.3} parent=0 // pred_fallthru
    _
  %v19 = vld [vmem:[%s1] sm:$0xf]
  %v20 = vld [vmem:[%s1 + $0x4] sm:$0xf]
  %v21 = vld [vmem:[%s1 + $0x8] sm:$0xf]
  %v22 = vld [vmem:[%s1 + $0xc] sm:$0xf]
  %v23 = vld [vmem:[#allocation2] sm:$0xff]
  %v24 = vld [vmem:[#allocation3] sm:$0xff]
  %v25 = vld [vmem:[%s0] sm:$0xff]
  %v26 = vpack.c.bf16 %v23, %v23
  %v31 = vunpack.c.l.b16 %v19
  %v32 = vunpack.c.l.b16 %v20
  %v33 = vunpack.c.l.b16 %v21
  %v34 = vunpack.c.l.b16 %v22
  %v35 = vpack.c.b16 %v32, %v31
  %v36 = vpack.c.b16 %v34, %v33
  %vm39 = vcmask 261120
  %v41 = vsel %vm39, %v26, 0
  %43 = vmatpush.bf16.msra.mxu0 0
  %44 = vmatpush.bf16.msra.mxu0 0
  %45 = vmatpush.bf16.msra.mxu0 0
  %46 = vmatpush.bf16.msra.mxu0 0
  %47 = vmatpush.bf16.msra.mxu0 0
  %48 = vmatpush.bf16.msra.mxu0 0
  %49 = vmatpush.bf16.msra.mxu0 %v36
  %50 = vmatpush.bf16.msra.mxu0 %v35
  %51 = vmatmul.bf16.gmra.mxu0 %v41
  %v52 = vpop.f32.mrf.mxu0
  %v53 = vadd.f32 0.0, %v52
  %v54 = vpop.f32.mrf.mxu0
  %55 = vdwg.mxu0
  %v56 = vadd.f32 %v25, %v53
  %v57 = vxor.u32 %v56, 2147483648
  %v58 = vmul.f32 %v57, 1.442695
  %v59 = vpow.pop %v58
  %v60 = vadd.f32 %v59, 1.0
  %v61 = vrcp.pop %v60
  %v62 = vmul.f32 %v60, %v61
  %v63 = vsub.f32 1.0, %v62
  %v64 = vmul.f32 %v61, %v63
  %v65 = vadd.f32 %v61, %v64
  %vm66 = vweird.f32 %v60
  %vm67 = vweird.f32 %v61
  %vm68 = vmor %vm66, %vm67
  %v69 = vsel %vm68, %v61, %v65
  %v70 = vand.u32 2147483647, %v60
  %vm71 = vcmp.eq.f32.partialorder %v70, 8.507059e+37
  %v72 = vand.u32 %v60, 2147483648
  %v73 = vor.u32 1.1754944e-38, %v72
  %v74 = vsel %vm71, %v73, %v69
  %v75 = vmul.f32 1.0, %v74
  %v76 = vtanh.pop %v56
  %78 = vrot.lane.b32.xlu0 %v24, 32
  %v79 = vpop.permute.xlu0 %78
  %v81 = vmul.f32 %v75, %v79
  %83 = vrot.lane.b32.xlu0 %v76, 64
  %v84 = vpop.permute.xlu0 %83
  %v86 = vmul.f32 %v75, %v84
  %88 = vrot.lane.b32.xlu0 %v86, 32
  %v89 = vpop.permute.xlu0 %88
  %v91 = vadd.f32 %v81, %v89
  %v92 = vtanh.pop %v91
  %94 = vrot.lane.b32.xlu0 %v92, 64
  %v95 = vpop.permute.xlu0 %94
  %v97 = vmul.f32 %v75, %v95
  %99 = vrot.lane.b32.xlu0 %v97, 32
  %v100 = vpop.permute.xlu0 %99
  %102 = vst.msk [vmem:[%s2] sm:$0xff] %vm39, %v100
  %s103 = scalar_lea.vmem %s0, 8
  %v104 = vld [vmem:[%s103] sm:$0xff]
  %v105 = vpack.c.bf16 %v97, %v97
  %107 = vrot.lane.b32.xlu0 %v105, 32
  %v108 = vpop.permute.xlu0 %107
  %v110 = vsel %vm39, %v108, 0
  %112 = vmatpush.bf16.msra.mxu0 0
  %113 = vmatpush.bf16.msra.mxu0 0
  %114 = vmatpush.bf16.msra.mxu0 0
  %115 = vmatpush.bf16.msra.mxu0 0
  %116 = vmatpush.bf16.msra.mxu0 0
  %117 = vmatpush.bf16.msra.mxu0 0
  %118 = vmatpush.bf16.msra.mxu0 %v36
  %119 = vmatpush.bf16.msra.mxu0 %v35
  %120 = vmatmul.bf16.gmra.mxu0 %v110
  %v121 = vpop.f32.mrf.mxu0
  %v122 = vadd.f32 0.0, %v121
  %v123 = vpop.f32.mrf.mxu0
  %124 = vdwg.mxu0
  %v125 = vadd.f32 %v104, %v122
  %v126 = vxor.u32 %v125, 2147483648
  %v127 = vmul.f32 %v126, 1.442695
  %v128 = vpow.pop %v127
  %v129 = vadd.f32 %v128, 1.0
  %v130 = vrcp.pop %v129
  %v131 = vmul.f32 %v129, %v130
  %v132 = vsub.f32 1.0, %v131
  %v133 = vmul.f32 %v130, %v132
  %v134 = vadd.f32 %v130, %v133
  %vm135 = vweird.f32 %v129
  %vm136 = vweird.f32 %v130
  %vm137 = vmor %vm135, %vm136
  %v138 = vsel %vm137, %v130, %v134
  %v139 = vand.u32 2147483647, %v129
  %vm140 = vcmp.eq.f32.partialorder %v139, 8.507059e+37
  %v141 = vand.u32 %v129, 2147483648
  %v142 = vor.u32 1.1754944e-38, %v141
  %v143 = vsel %vm140, %v142, %v138
  %v144 = vmul.f32 1.0, %v143
  %v145 = vtanh.pop %v125
  %v146 = vmul.f32 %v144, %v91
  %148 = vrot.lane.b32.xlu0 %v145, 64
  %v149 = vpop.permute.xlu0 %148
  %v151 = vmul.f32 %v144, %v149
  %153 = vrot.lane.b32.xlu0 %v151, 32
  %v154 = vpop.permute.xlu0 %153
  %v156 = vadd.f32 %v146, %v154
  %v157 = vtanh.pop %v156
  %159 = vrot.lane.b32.xlu0 %v157, 64
  %v160 = vpop.permute.xlu0 %159
  %v162 = vmul.f32 %v144, %v160
  %164 = vrot.lane.b32.xlu0 %v162, 32
  %v165 = vpop.permute.xlu0 %164
  %s167 = scalar_lea.vmem %s2, 8
  %168 = vst.msk [vmem:[%s167] sm:$0xff] %vm39, %v165
  %s169 = scalar_lea.vmem %s0, 16
  %v170 = vld [vmem:[%s169] sm:$0xff]
  %v171 = vpack.c.bf16 %v162, %v162
  %173 = vrot.lane.b32.xlu0 %v171, 32
  %v174 = vpop.permute.xlu0 %173
  %v176 = vsel %vm39, %v174, 0
  %178 = vmatpush.bf16.msra.mxu0 0
  %179 = vmatpush.bf16.msra.mxu0 0
  %180 = vmatpush.bf16.msra.mxu0 0
  %181 = vmatpush.bf16.msra.mxu0 0
  %182 = vmatpush.bf16.msra.mxu0 0
  %183 = vmatpush.bf16.msra.mxu0 0
  %184 = vmatpush.bf16.msra.mxu0 %v36
  %185 = vmatpush.bf16.msra.mxu0 %v35
  %186 = vmatmul.bf16.gmra.mxu0 %v176
  %v187 = vpop.f32.mrf.mxu0
  %v188 = vadd.f32 0.0, %v187
  %v189 = vpop.f32.mrf.mxu0
  %190 = vdwg.mxu0
  %v191 = vadd.f32 %v170, %v188
  %v192 = vxor.u32 %v191, 2147483648
  %v193 = vmul.f32 %v192, 1.442695
  %v194 = vpow.pop %v193
  %v195 = vadd.f32 %v194, 1.0
  %v196 = vrcp.pop %v195
  %v197 = vmul.f32 %v195, %v196
  %v198 = vsub.f32 1.0, %v197
  %v199 = vmul.f32 %v196, %v198
  %v200 = vadd.f32 %v196, %v199
  %vm201 = vweird.f32 %v195
  %vm202 = vweird.f32 %v196
  %vm203 = vmor %vm201, %vm202
  %v204 = vsel %vm203, %v196, %v200
  %v205 = vand.u32 2147483647, %v195
  %vm206 = vcmp.eq.f32.partialorder %v205, 8.507059e+37
  %v207 = vand.u32 %v195, 2147483648
  %v208 = vor.u32 1.1754944e-38, %v207
  %v209 = vsel %vm206, %v208, %v204
  %v210 = vmul.f32 1.0, %v209
  %v211 = vtanh.pop %v191
  %v212 = vmul.f32 %v210, %v156
  %214 = vrot.lane.b32.xlu0 %v211, 64
  %v215 = vpop.permute.xlu0 %214
  %v217 = vmul.f32 %v210, %v215
  %219 = vrot.lane.b32.xlu0 %v217, 32
  %v220 = vpop.permute.xlu0 %219
  %v222 = vadd.f32 %v212, %v220
  %v223 = vtanh.pop %v222
  %225 = vrot.lane.b32.xlu0 %v223, 64
  %v226 = vpop.permute.xlu0 %225
  %v228 = vmul.f32 %v210, %v226
  %230 = vrot.lane.b32.xlu0 %v228, 32
  %v231 = vpop.permute.xlu0 %230
  %s233 = scalar_lea.vmem %s2, 16
  %234 = vst.msk [vmem:[%s233] sm:$0xff] %vm39, %v231
  %s235 = scalar_lea.vmem %s0, 24
  %v236 = vld [vmem:[%s235] sm:$0xff]
  %v237 = vpack.c.bf16 %v228, %v228
  %239 = vrot.lane.b32.xlu0 %v237, 32
  %v240 = vpop.permute.xlu0 %239
  %v242 = vsel %vm39, %v240, 0
  %244 = vmatpush.bf16.msra.mxu0 0
  %245 = vmatpush.bf16.msra.mxu0 0
  %246 = vmatpush.bf16.msra.mxu0 0
  %247 = vmatpush.bf16.msra.mxu0 0
  %248 = vmatpush.bf16.msra.mxu0 0
  %249 = vmatpush.bf16.msra.mxu0 0
  %250 = vmatpush.bf16.msra.mxu0 %v36
  %251 = vmatpush.bf16.msra.mxu0 %v35
  %252 = vmatmul.bf16.gmra.mxu0 %v242
  %v253 = vpop.f32.mrf.mxu0
  %v254 = vadd.f32 0.0, %v253
  %v255 = vpop.f32.mrf.mxu0
  %256 = vdwg.mxu0
  %v257 = vadd.f32 %v236, %v254
  %v258 = vxor.u32 %v257, 2147483648
  %v259 = vmul.f32 %v258, 1.442695
  %v260 = vpow.pop %v259
  %v261 = vadd.f32 %v260, 1.0
  %v262 = vrcp.pop %v261
  %v263 = vmul.f32 %v261, %v262
  %v264 = vsub.f32 1.0, %v263
  %v265 = vmul.f32 %v262, %v264
  %v266 = vadd.f32 %v262, %v265
  %vm267 = vweird.f32 %v261
  %vm268 = vweird.f32 %v262
  %vm269 = vmor %vm267, %vm268
  %v270 = vsel %vm269, %v262, %v266
  %v271 = vand.u32 2147483647, %v261
  %vm272 = vcmp.eq.f32.partialorder %v271, 8.507059e+37
  %v273 = vand.u32 %v261, 2147483648
  %v274 = vor.u32 1.1754944e-38, %v273
  %v275 = vsel %vm272, %v274, %v270
  %v276 = vmul.f32 1.0, %v275
  %v277 = vtanh.pop %v257
  %v278 = vmul.f32 %v276, %v222
  %280 = vrot.lane.b32.xlu0 %v277, 64
  %v281 = vpop.permute.xlu0 %280
  %v283 = vmul.f32 %v276, %v281
  %285 = vrot.lane.b32.xlu0 %v283, 32
  %v286 = vpop.permute.xlu0 %285
  %v288 = vadd.f32 %v278, %v286
  %v289 = vtanh.pop %v288
  %291 = vrot.lane.b32.xlu0 %v289, 64
  %v292 = vpop.permute.xlu0 %291
  %v294 = vmul.f32 %v276, %v292
  %296 = vrot.lane.b32.xlu0 %v294, 32
  %v297 = vpop.permute.xlu0 %296
  %s299 = scalar_lea.vmem %s2, 24
  %300 = vst.msk [vmem:[%s299] sm:$0xff] %vm39, %v297
  %s301 = scalar_lea.vmem %s0, 32
  %v302 = vld [vmem:[%s301] sm:$0xff]
  %v303 = vpack.c.bf16 %v294, %v294
  %305 = vrot.lane.b32.xlu0 %v303, 32
  %v306 = vpop.permute.xlu0 %305
  %v308 = vsel %vm39, %v306, 0
  %310 = vmatpush.bf16.msra.mxu0 0
  %311 = vmatpush.bf16.msra.mxu0 0
  %312 = vmatpush.bf16.msra.mxu0 0
  %313 = vmatpush.bf16.msra.mxu0 0
  %314 = vmatpush.bf16.msra.mxu0 0
  %315 = vmatpush.bf16.msra.mxu0 0
  %316 = vmatpush.bf16.msra.mxu0 %v36
  %317 = vmatpush.bf16.msra.mxu0 %v35
  %318 = vmatmul.bf16.gmra.mxu0 %v308
  %v319 = vpop.f32.mrf.mxu0
  %v320 = vadd.f32 0.0, %v319
  %v321 = vpop.f32.mrf.mxu0
  %322 = vdwg.mxu0
  %v323 = vadd.f32 %v302, %v320
  %v324 = vxor.u32 %v323, 2147483648
  %v325 = vmul.f32 %v324, 1.442695
  %v326 = vpow.pop %v325
  %v327 = vadd.f32 %v326, 1.0
  %v328 = vrcp.pop %v327
  %v329 = vmul.f32 %v327, %v328
  %v330 = vsub.f32 1.0, %v329
  %v331 = vmul.f32 %v328, %v330
  %v332 = vadd.f32 %v328, %v331
  %vm333 = vweird.f32 %v327
  %vm334 = vweird.f32 %v328
  %vm335 = vmor %vm333, %vm334
  %v336 = vsel %vm335, %v328, %v332
  %v337 = vand.u32 2147483647, %v327
  %vm338 = vcmp.eq.f32.partialorder %v337, 8.507059e+37
  %v339 = vand.u32 %v327, 2147483648
  %v340 = vor.u32 1.1754944e-38, %v339
  %v341 = vsel %vm338, %v340, %v336
  %v342 = vmul.f32 1.0, %v341
  %v343 = vtanh.pop %v323
  %v344 = vmul.f32 %v342, %v288
  %346 = vrot.lane.b32.xlu0 %v343, 64
  %v347 = vpop.permute.xlu0 %346
  %v349 = vmul.f32 %v342, %v347
  %351 = vrot.lane.b32.xlu0 %v349, 32
  %v352 = vpop.permute.xlu0 %351
  %v354 = vadd.f32 %v344, %v352
  %v355 = vtanh.pop %v354
  %357 = vrot.lane.b32.xlu0 %v355, 64
  %v358 = vpop.permute.xlu0 %357
  %v360 = vmul.f32 %v342, %v358
  %362 = vrot.lane.b32.xlu0 %v360, 32
  %v363 = vpop.permute.xlu0 %362
  %s365 = scalar_lea.vmem %s2, 32
  %366 = vst.msk [vmem:[%s365] sm:$0xff] %vm39, %v363
  %s367 = scalar_lea.vmem %s0, 40
  %v368 = vld [vmem:[%s367] sm:$0xff]
  %v369 = vpack.c.bf16 %v360, %v360
  %371 = vrot.lane.b32.xlu0 %v369, 32
  %v372 = vpop.permute.xlu0 %371
  %v374 = vsel %vm39, %v372, 0
  %376 = vmatpush.bf16.msra.mxu0 0
  %377 = vmatpush.bf16.msra.mxu0 0
  %378 = vmatpush.bf16.msra.mxu0 0
  %379 = vmatpush.bf16.msra.mxu0 0
  %380 = vmatpush.bf16.msra.mxu0 0
  %381 = vmatpush.bf16.msra.mxu0 0
  %382 = vmatpush.bf16.msra.mxu0 %v36
  %383 = vmatpush.bf16.msra.mxu0 %v35
  %384 = vmatmul.bf16.gmra.mxu0 %v374
  %v385 = vpop.f32.mrf.mxu0
  %v386 = vadd.f32 0.0, %v385
  %v387 = vpop.f32.mrf.mxu0
  %388 = vdwg.mxu0
  %v389 = vadd.f32 %v368, %v386
  %v390 = vxor.u32 %v389, 2147483648
  %v391 = vmul.f32 %v390, 1.442695
  %v392 = vpow.pop %v391
  %v393 = vadd.f32 %v392, 1.0
  %v394 = vrcp.pop %v393
  %v395 = vmul.f32 %v393, %v394
  %v396 = vsub.f32 1.0, %v395
  %v397 = vmul.f32 %v394, %v396
  %v398 = vadd.f32 %v394, %v397
  %vm399 = vweird.f32 %v393
  %vm400 = vweird.f32 %v394
  %vm401 = vmor %vm399, %vm400
  %v402 = vsel %vm401, %v394, %v398
  %v403 = vand.u32 2147483647, %v393
  %vm404 = vcmp.eq.f32.partialorder %v403, 8.507059e+37
  %v405 = vand.u32 %v393, 2147483648
  %v406 = vor.u32 1.1754944e-38, %v405
  %v407 = vsel %vm404, %v406, %v402
  %v408 = vmul.f32 1.0, %v407
  %v409 = vtanh.pop %v389
  %v410 = vmul.f32 %v408, %v354
  %412 = vrot.lane.b32.xlu0 %v409, 64
  %v413 = vpop.permute.xlu0 %412
  %v415 = vmul.f32 %v408, %v413
  %417 = vrot.lane.b32.xlu0 %v415, 32
  %v418 = vpop.permute.xlu0 %417
  %v420 = vadd.f32 %v410, %v418
  %v421 = vtanh.pop %v420
  %423 = vrot.lane.b32.xlu0 %v421, 64
  %v424 = vpop.permute.xlu0 %423
  %v426 = vmul.f32 %v408, %v424
  %428 = vrot.lane.b32.xlu0 %v426, 32
  %v429 = vpop.permute.xlu0 %428
  %s431 = scalar_lea.vmem %s2, 40
  %432 = vst.msk [vmem:[%s431] sm:$0xff] %vm39, %v429
  %s433 = scalar_lea.vmem %s0, 48
  %v434 = vld [vmem:[%s433] sm:$0xff]
  %v435 = vpack.c.bf16 %v426, %v426
  %437 = vrot.lane.b32.xlu0 %v435, 32
  %v438 = vpop.permute.xlu0 %437
  %v440 = vsel %vm39, %v438, 0
  %442 = vmatpush.bf16.msra.mxu0 0
  %443 = vmatpush.bf16.msra.mxu0 0
  %444 = vmatpush.bf16.msra.mxu0 0
  %445 = vmatpush.bf16.msra.mxu0 0
  %446 = vmatpush.bf16.msra.mxu0 0
  %447 = vmatpush.bf16.msra.mxu0 0
  %448 = vmatpush.bf16.msra.mxu0 %v36
  %449 = vmatpush.bf16.msra.mxu0 %v35
  %450 = vmatmul.bf16.gmra.mxu0 %v440
  %v451 = vpop.f32.mrf.mxu0
  %v452 = vadd.f32 0.0, %v451
  %v453 = vpop.f32.mrf.mxu0
  %454 = vdwg.mxu0
  %v455 = vadd.f32 %v434, %v452
  %v456 = vxor.u32 %v455, 2147483648
  %v457 = vmul.f32 %v456, 1.442695
  %v458 = vpow.pop %v457
  %v459 = vadd.f32 %v458, 1.0
  %v460 = vrcp.pop %v459
  %v461 = vmul.f32 %v459, %v460
  %v462 = vsub.f32 1.0, %v461
  %v463 = vmul.f32 %v460, %v462
  %v464 = vadd.f32 %v460, %v463
  %vm465 = vweird.f32 %v459
  %vm466 = vweird.f32 %v460
  %vm467 = vmor %vm465, %vm466
  %v468 = vsel %vm467, %v460, %v464
  %v469 = vand.u32 2147483647, %v459
  %vm470 = vcmp.eq.f32.partialorder %v469, 8.507059e+37
  %v471 = vand.u32 %v459, 2147483648
  %v472 = vor.u32 1.1754944e-38, %v471
  %v473 = vsel %vm470, %v472, %v468
  %v474 = vmul.f32 1.0, %v473
  %v475 = vtanh.pop %v455
  %v476 = vmul.f32 %v474, %v420
  %478 = vrot.lane.b32.xlu0 %v475, 64
  %v479 = vpop.permute.xlu0 %478
  %v481 = vmul.f32 %v474, %v479
  %483 = vrot.lane.b32.xlu0 %v481, 32
  %v484 = vpop.permute.xlu0 %483
  %v486 = vadd.f32 %v476, %v484
  %v487 = vtanh.pop %v486
  %489 = vrot.lane.b32.xlu0 %v487, 64
  %v490 = vpop.permute.xlu0 %489
  %v492 = vmul.f32 %v474, %v490
  %494 = vrot.lane.b32.xlu0 %v492, 32
  %v495 = vpop.permute.xlu0 %494
  %s497 = scalar_lea.vmem %s2, 48
  %498 = vst.msk [vmem:[%s497] sm:$0xff] %vm39, %v495
  %s499 = scalar_lea.vmem %s0, 56
  %v500 = vld [vmem:[%s499] sm:$0xff]
  %v501 = vpack.c.bf16 %v492, %v492
  %503 = vrot.lane.b32.xlu0 %v501, 32
  %v504 = vpop.permute.xlu0 %503
  %v506 = vsel %vm39, %v504, 0
  %508 = vmatpush.bf16.msra.mxu0 0
  %509 = vmatpush.bf16.msra.mxu0 0
  %510 = vmatpush.bf16.msra.mxu0 0
  %511 = vmatpush.bf16.msra.mxu0 0
  %512 = vmatpush.bf16.msra.mxu0 0
  %513 = vmatpush.bf16.msra.mxu0 0
  %514 = vmatpush.bf16.msra.mxu0 %v36
  %515 = vmatpush.bf16.msra.mxu0 %v35
  %516 = vmatmul.bf16.gmra.mxu0 %v506
  %v517 = vpop.f32.mrf.mxu0
  %v518 = vadd.f32 0.0, %v517
  %v519 = vpop.f32.mrf.mxu0
  %520 = vdwg.mxu0
  %v521 = vadd.f32 %v500, %v518
  %v522 = vxor.u32 %v521, 2147483648
  %v523 = vmul.f32 %v522, 1.442695
  %v524 = vpow.pop %v523
  %v525 = vadd.f32 %v524, 1.0
  %v526 = vrcp.pop %v525
  %v527 = vmul.f32 %v525, %v526
  %v528 = vsub.f32 1.0, %v527
  %v529 = vmul.f32 %v526, %v528
  %v530 = vadd.f32 %v526, %v529
  %vm531 = vweird.f32 %v525
  %vm532 = vweird.f32 %v526
  %vm533 = vmor %vm531, %vm532
  %v534 = vsel %vm533, %v526, %v530
  %v535 = vand.u32 2147483647, %v525
  %vm536 = vcmp.eq.f32.partialorder %v535, 8.507059e+37
  %v537 = vand.u32 %v525, 2147483648
  %v538 = vor.u32 1.1754944e-38, %v537
  %v539 = vsel %vm536, %v538, %v534
  %v540 = vmul.f32 1.0, %v539
  %v541 = vtanh.pop %v521
  %v542 = vmul.f32 %v540, %v486
  %544 = vrot.lane.b32.xlu0 %v541, 64
  %v545 = vpop.permute.xlu0 %544
  %v547 = vmul.f32 %v540, %v545
  %549 = vrot.lane.b32.xlu0 %v547, 32
  %v550 = vpop.permute.xlu0 %549
  %v552 = vadd.f32 %v542, %v550
  %v553 = vtanh.pop %v552
  %555 = vrot.lane.b32.xlu0 %v553, 64
  %v556 = vpop.permute.xlu0 %555
  %v558 = vmul.f32 %v540, %v556
  %560 = vrot.lane.b32.xlu0 %v558, 32
  %v561 = vpop.permute.xlu0 %560
  %s563 = scalar_lea.vmem %s2, 56
  %564 = vst.msk [vmem:[%s563] sm:$0xff] %vm39, %v561
  %565 = vst.msk [vmem:[#allocation2] sm:$0xff] %vm39, %v561
  %567 = vrot.lane.b32.xlu0 %v552, 96
  %v568 = vpop.permute.xlu0 %567
  %570 = vst.msk [vmem:[#allocation3] sm:$0xff] %vm39, %v568
  // Predicated region
  $region14: #{single_rnn_lstm.3} parent=0 // pred_check
    _
  $region15: #{single_rnn_lstm.3} parent=0 // pred_check_branch
    %572 = sbr.rel (0) target = $region17
  $region16: #{single_rnn_lstm.3} parent=0 // pred_region
    _
  $region17: #{single_rnn_lstm.3} parent=0 // pred_fallthru
    _
  // Predicated region
  $region18: #{single_rnn_lstm.3} parent=0 // pred_check
    _
  $region19: #{single_rnn_lstm.3} parent=0 // pred_check_branch
    %574 = sbr.rel (0) target = $region21
  $region20: #{single_rnn_lstm.3} parent=0 // pred_region
    _
  $region21: #{single_rnn_lstm.3} parent=0 // pred_fallthru
    _

</llo_original>
